<compile_context>
chip_gen: v7x
topology: tpu7x:2x2x1
jax: 0.10.0
libtpu: 0.0.40
codegen_flags: <defaults>
</compile_context>

<pallas_src>
import functools

import jax
import jax.numpy as jnp
from jax.experimental import pallas as pl
from jax.experimental.pallas import tpu as pltpu


# ----------------------------------------------------------------------------
# Kernel
# ----------------------------------------------------------------------------
def _recon_kernel(x_ref, xprev_ref, xnext_ref, w_ref, b_ref, o_ref, *, bf16_act):
    # x_ref:     (1, TD, H, W*C)   current D-tile, lane-dense, bf16
    # xprev_ref: (1, 1,  H, W*C)   halo row d0-1   (clamped; masked if first)
    # xnext_ref: (1, 1,  H, W*C)   halo row d0+TD  (clamped; masked if last)
    # w_ref:     (W*C, 7*W*Co)     packed, BN-scaled conv weights, bf16
    #            taps 0..2 -> branch0 (D axis) k=0..2, block-diagonal over W
    #            taps 3..5 -> branch1 (H axis) k=0..2, block-diagonal over W
    #            tap  6    -> branch2 (W axis) conv, block-tridiagonal
    # b_ref:     (3, 1, 1, W*Co)   folded BN bias per branch, f32
    # o_ref:     (1, TD, H, W*Co)
    _, TD, H, WC = x_ref.shape
    WCo = o_ref.shape[3]

    d_idx = pl.program_id(1)
    not_first = (d_idx > 0).astype(jnp.bfloat16)
    not_last = (d_idx < pl.num_programs(1) - 1).astype(jnp.bfloat16)

    # Halo-extended LHS along D: ONE fused MXU call computes all 7 packed taps
    # for the tile body AND both halo rows (no separate halo matmuls).
    xe = jnp.concatenate(
        [xprev_ref[0] * not_first, x_ref[0], xnext_ref[0] * not_last], axis=0)
    p = jnp.dot(xe.reshape((TD + 2) * H, WC), w_ref[...],
                preferred_element_type=jnp.float32)
    p = p.reshape(TD + 2, H, 7 * WCo)

    def tap(t, d0, d1):
        # rows [d0, d1) of the extended tile; vreg-aligned lane block of tap t
        return p[d0:d1, :, t * WCo:(t + 1) * WCo]

    # --- branch 0: conv(3,1,1) along D: pure leading-dim slices of extended p --
    pre0 = tap(0, 0, TD) + tap(1, 1, TD + 1) + tap(2, 2, TD + 2) + b_ref[0]

    # --- branch 1: conv(1,3,1) along H (H not tiled -> zero pad at H edges) ----
    p3 = tap(3, 1, TD + 1)
    p4 = tap(4, 1, TD + 1)
    p5 = tap(5, 1, TD + 1)
    b1 = b_ref[1]
    pre1 = jnp.concatenate(
        [p4[:, :1] + p5[:, 1:2] + b1,                          # h = 0
         p4[:, 1:H - 1] + p3[:, :H - 2] + p5[:, 2:] + b1,      # interior
         p4[:, H - 1:] + p3[:, H - 2:H - 1] + b1],             # h = H-1
        axis=1)

    # --- branch 2: conv(1,1,3) along W: fully folded into the tridiagonal tap --
    pre2 = tap(6, 1, TD + 1) + b_ref[2]

    if bf16_act:
        # bf16 EUP sigmoid (v6e/v7x ~2x); branch sum accumulated in f32.
        total = (jax.nn.sigmoid(pre0.astype(jnp.bfloat16)).astype(jnp.float32)
                 + jax.nn.sigmoid(pre1.astype(jnp.bfloat16)).astype(jnp.float32)
                 + jax.nn.sigmoid(pre2.astype(jnp.bfloat16)).astype(jnp.float32))
    else:
        total = (jax.nn.sigmoid(pre0) + jax.nn.sigmoid(pre1)
                 + jax.nn.sigmoid(pre2))

    # Gate by the input features (f32 multiply), cast to the output dtype.
    o_ref[0] = (total * x_ref[0].astype(jnp.float32)).astype(o_ref.dtype)


# ----------------------------------------------------------------------------
# Weight packing (wrapper side)
# ----------------------------------------------------------------------------
def _pack_weights(weights, scale, W):
    """weights: (3, 3, C, Co) f32, scale: (3, Co).  Returns (W*C, 7*W*Co) bf16."""
    C, Co = weights.shape[2], weights.shape[3]
    # NOTE: BN scale is folded into bf16 weights; if gamma/sqrt(var+eps) spans a
    # very wide dynamic range, apply the scale in the f32 epilogue instead.
    ws = (weights * scale[:, None, None, :]).astype(jnp.float32)

    def block(mat, wk):  # mat: (W, W) coupling w -> w', wk: (C, Co)
        return jnp.einsum("vu,co->vcuo", mat, wk).reshape(W * C, W * Co)

    eye = jnp.eye(W, dtype=jnp.float32)
    taps = [block(eye, ws[0, kk]) for kk in range(3)]            # D-axis taps
    taps += [block(eye, ws[1, kk]) for kk in range(3)]           # H-axis taps
    # W-axis conv folded into a block-tridiagonal matrix:
    #   out[w'] = x[w'-1]@w2[0] + x[w']@w2[1] + x[w'+1]@w2[2]
    tri = sum(block(jnp.eye(W, k=1 - kk, dtype=jnp.float32), ws[2, kk])
              for kk in range(3))
    taps.append(tri)
    return jnp.concatenate(taps, axis=1).astype(jnp.bfloat16)


# ----------------------------------------------------------------------------
# VMEM budgeting helpers
# ----------------------------------------------------------------------------
def _vmem_capacity_bytes():
    try:
        return int(pltpu.get_tpu_info().vmem_capacity_bytes)
    except Exception:
        return 64 * 1024 * 1024          # conservative (v7x per-TensorCore)


def _vmem_bytes_estimate(TD, H, W, C, Co, out_itemsize):
    WC, WCo = W * C, W * Co
    weights = WC * 7 * WCo * 2                               # resident bf16 pack
    bias = 3 * WCo * 4
    per_step_in = (TD * H * WC + 2 * H * WC) * 2             # bf16 tile + halos
    per_step_out = TD * H * WCo * out_itemsize
    pipelined = 2 * (per_step_in + per_step_out)             # double buffered
    temps = ((TD + 2) * H * WC * 2                           # xe (bf16)
             + (TD + 2) * H * 7 * WCo * 4                    # p (f32)
             + 4 * TD * H * WCo * 4)                         # pre*/total (f32)
    return weights + bias + pipelined + temps


def _select_d_tile(D, H, W, C, Co, out_itemsize, vmem_cap):
    budget = vmem_cap // 2
    for td in sorted([t for t in range(1, D + 1) if D % t == 0], reverse=True):
        if _vmem_bytes_estimate(td, H, W, C, Co, out_itemsize) <= budget:
            return td
    # TODO(synk): tile the W axis (packed weight is O(W^2*C*Co)) for this config.
    raise ValueError("ReconBlock Pallas kernel: packed weight + minimal tile "
                     "exceed the VMEM budget; tile W for this configuration.")


# ----------------------------------------------------------------------------
# Wrapper
# ----------------------------------------------------------------------------
@functools.partial(jax.jit,
                   static_argnames=("eps", "d_tile", "out_dtype", "bf16_act"))
def recon_block(x, weights, bn_gamma, bn_beta, bn_mean, bn_var,
                eps=1e-5, d_tile=None, out_dtype=jnp.bfloat16, bf16_act=True):
    """x: (N, D, H, W, C); weights: (3, 3, Cin, Cout); bn_*: (3, Cout)."""
    N, D, H, W, C = x.shape
    Co = weights.shape[-1]
    if C != Co:
        raise ValueError("ReconBlock gates by input features: Cin must equal Cout")
    if H < 3:
        raise ValueError("kernel assumes H >= 3 (3-wide conv along H)")
    WC, WCo = W * C, W * Co
    out_itemsize = jnp.dtype(out_dtype).itemsize

    vmem_cap = _vmem_capacity_bytes()
    if d_tile is None:
        TD = _select_d_tile(D, H, W, C, Co, out_itemsize, vmem_cap)
    else:
        TD = int(d_tile)
        if TD < 1 or D % TD:
            raise ValueError(f"d_tile={TD} must divide D={D} and be >= 1")
        if _vmem_bytes_estimate(TD, H, W, C, Co, out_itemsize) > 0.9 * vmem_cap:
            raise ValueError("d_tile too large for this chip's VMEM; reduce it")
    est = _vmem_bytes_estimate(TD, H, W, C, Co, out_itemsize)
    vmem_limit = int(min(0.94 * vmem_cap, max(32 * 1024 * 1024, 2.0 * est)))

    # Eval-mode BatchNorm1d folded to per-channel scale/bias.
    scale = bn_gamma / jnp.sqrt(bn_var + eps)                     # (3, Co)
    bias = bn_beta - bn_mean * scale                              # (3, Co)
    w_packed = _pack_weights(weights.astype(jnp.float32), scale, W)
    bias_fold = jnp.broadcast_to(bias[:, None, :], (3, W, Co)).reshape(3, 1, 1, WCo)

    # Lane-dense bf16 input view (last dim = W*C): halves HBM/DMA read traffic.
    x2 = x.reshape(N, D, H, WC).astype(jnp.bfloat16)

    def xmain_map(n, d): return (n, d, 0, 0)
    def xprev_map(n, d): return (n, jnp.maximum(d * TD - 1, 0), 0, 0)
    def xnext_map(n, d): return (n, jnp.minimum((d + 1) * TD, D - 1), 0, 0)
    def wconst_map(n, d): return (0, 0)
    def bconst_map(n, d): return (0, 0, 0, 0)

    n_tiles = N * (D // TD)
    cost = pl.CostEstimate(
        # packed matmul does the full (block-diagonal included) K work:
        flops=2 * n_tiles * (TD + 2) * H * WC * 7 * WCo,
        transcendentals=3 * N * D * H * W * Co,
        bytes_accessed=int(n_tiles * (TD + 2) * H * WC * 2      # bf16 in + halos
                           + N * D * H * WCo * out_itemsize     # output
                           + WC * 7 * WCo * 2 + 3 * WCo * 4))   # weights + bias

    out = pl.pallas_call(
        functools.partial(_recon_kernel, bf16_act=bf16_act),
        out_shape=jax.ShapeDtypeStruct((N, D, H, WCo), out_dtype),
        grid_spec=pltpu.PrefetchScalarGridSpec(
            num_scalar_prefetch=0,
            grid=(N, D // TD),
            in_specs=[
                pl.BlockSpec((1, TD, H, WC), xmain_map),
                pl.BlockSpec((1, 1, H, WC), xprev_map),
                pl.BlockSpec((1, 1, H, WC), xnext_map),
                pl.BlockSpec((WC, 7 * WCo), wconst_map),
                pl.BlockSpec((3, 1, 1, WCo), bconst_map),
            ],
            out_specs=pl.BlockSpec((1, TD, H, WCo), xmain_map),
        ),
        compiler_params=pltpu.CompilerParams(
            # batch axis keeps both v7x TensorCores busy even when D//TD == 1
            dimension_semantics=("parallel", "parallel"),
            vmem_limit_bytes=vmem_limit),
        cost_estimate=cost,
    )(x2, x2, x2, w_packed, bias_fold)

    return out.reshape(N, D, H, W, Co)


# ----------------------------------------------------------------------------
# Pure-JAX float32 reference (same forward semantics, no Pallas)
# ----------------------------------------------------------------------------
def _shift(arr, off, axis):
    """Zero-padded shift: result[i] = arr[i + off] along `axis` (off in {-1,0,1})."""
    if off == 0:
        return arr
    zshape = list(arr.shape)
    zshape[axis] = 1
    z = jnp.zeros(zshape, arr.dtype)
    sl = [slice(None)] * arr.ndim
    if off == 1:
        sl[axis] = slice(1, None)
        return jnp.concatenate([arr[tuple(sl)], z], axis=axis)
    sl[axis] = slice(0, -1)
    return jnp.concatenate([z, arr[tuple(sl)]], axis=axis)


def recon_block_ref(x, weights, bn_gamma, bn_beta, bn_mean, bn_var, eps=1e-5):
    scale = bn_gamma / jnp.sqrt(bn_var + eps)
    bias = bn_beta - bn_mean * scale
    xf = x.astype(jnp.float32)
    total = 0.0
    for b, axis in enumerate((1, 2, 3)):       # (3,1,1), (1,3,1), (1,1,3)
        acc = 0.0
        for k in range(3):
            xs = _shift(xf, k - 1, axis)
            acc = acc + jnp.einsum("ndhwc,co->ndhwo", xs, weights[b, k])
        total = total + jax.nn.sigmoid(acc * scale[b] + bias[b])
    return total * xf


if __name__ == "__main__":
    key = jax.random.PRNGKey(0)
    k_x, k_w, k_g, k_b, k_m, k_v = jax.random.split(key, 6)

    N, D, H, W = 2, 16, 16, 8
    Cin = Cout = 16                       # W*C = 128 -> fully lane-dense blocks

    x = jax.random.normal(k_x, (N, D, H, W, Cin), dtype=jnp.float32)
    weights = 0.1 * jax.random.normal(k_w, (3, 3, Cin, Cout), dtype=jnp.float32)
    bn_gamma = 0.5 + jax.random.uniform(k_g, (3, Cout), dtype=jnp.float32)
    bn_beta = 0.1 * jax.random.normal(k_b, (3, Cout), dtype=jnp.float32)
    bn_mean = 0.1 * jax.random.normal(k_m, (3, Cout), dtype=jnp.float32)
    bn_var = 0.5 + jax.random.uniform(k_v, (3, Cout), dtype=jnp.float32)

    # Defaults: auto d_tile (-> 16 here, M = 288 matmul rows), bf16 in/out,
    # bf16 sigmoid.
    out = recon_block(x, weights, bn_gamma, bn_beta, bn_mean, bn_var)
    out = jax.block_until_ready(out)
    assert out.shape == (N, D, H, W, Cout)

    ref = recon_block_ref(x, weights, bn_gamma, bn_beta, bn_mean, bn_var)
    outf = out.astype(jnp.float32)
    err = jnp.abs(outf - ref)
    # bf16 inputs/weights/activations/output (per perf guidance) vs. pure-f32
    # reference: worst-case elementwise deviation after sigmoid/gating is a few
    # 1e-2; mean error stays at the 1e-3 level.
    assert bool(jnp.all(err <= 8e-2 + 3e-2 * jnp.abs(ref))), "mismatch vs reference"
    assert float(jnp.mean(err)) < 1e-2, "mean error too large vs reference"

    print("KERNEL_OK")
</pallas_src>

<mosaic_0001>
module attributes {stable_mosaic.version = 11 : i64} {
  func.func @_recon_kernel(%arg0: i32, %arg1: i32, %arg2: memref<1x16x16x128xbf16, #tpu.memory_space<vmem>>, %arg3: memref<1x1x16x128xbf16, #tpu.memory_space<vmem>>, %arg4: memref<1x1x16x128xbf16, #tpu.memory_space<vmem>>, %arg5: memref<128x896xbf16, #tpu.memory_space<vmem>>, %arg6: memref<3x1x1x128xf32, #tpu.memory_space<vmem>>, %arg7: memref<1x16x16x128xbf16, #tpu.memory_space<vmem>>) attributes {dimension_semantics = [#tpu.dimension_semantics<parallel>, #tpu.dimension_semantics<parallel>], iteration_bounds = array<i64: 2, 1>, scalar_prefetch = 0 : i64, scratch_operands = 0 : i64, tpu.core_type = #tpu.core_type<tc>, window_params = [{transform_indices = @transform_0, window_bounds = array<i64: 1, 16, 16, 128>}, {transform_indices = @transform_1, window_bounds = array<i64: 1, 1, 16, 128>}, {transform_indices = @transform_2, window_bounds = array<i64: 1, 1, 16, 128>}, {pipeline_mode = #tpu.pipeline_mode<synchronous>, transform_indices = @transform_3, window_bounds = array<i64: 128, 896>}, {pipeline_mode = #tpu.pipeline_mode<synchronous>, transform_indices = @transform_4, window_bounds = array<i64: 3, 1, 1, 128>}, {transform_indices = @transform_5, window_bounds = array<i64: 1, 16, 16, 128>}]} {
    %c0_i32 = arith.constant 0 : i32
    %0 = arith.cmpi sgt, %arg1, %c0_i32 : i32
    %1 = arith.extui %0 : i1 to i32
    %2 = arith.sitofp %1 : i32 to f32
    %3 = arith.truncf %2 : f32 to bf16
    %c0_i32_0 = arith.constant 0 : i32
    %4 = arith.cmpi slt, %arg1, %c0_i32_0 : i32
    %5 = arith.extui %4 : i1 to i32
    %6 = arith.sitofp %5 : i32 to f32
    %7 = arith.truncf %6 : f32 to bf16
    %c0 = arith.constant 0 : index
    %c0_1 = arith.constant 0 : index
    %c0_2 = arith.constant 0 : index
    %c0_3 = arith.constant 0 : index
    %8 = vector.load %arg3[%c0, %c0_1, %c0_2, %c0_3] : memref<1x1x16x128xbf16, #tpu.memory_space<vmem>>, vector<1x1x16x128xbf16>
    %9 = vector.shape_cast %8 : vector<1x1x16x128xbf16> to vector<1x16x128xbf16>
    %10 = vector.broadcast %3 : bf16 to vector<1x16x128xbf16>
    %11 = arith.mulf %9, %10 : vector<1x16x128xbf16>
    %c0_4 = arith.constant 0 : index
    %c0_5 = arith.constant 0 : index
    %c0_6 = arith.constant 0 : index
    %c0_7 = arith.constant 0 : index
    %12 = vector.load %arg2[%c0_4, %c0_5, %c0_6, %c0_7] : memref<1x16x16x128xbf16, #tpu.memory_space<vmem>>, vector<1x16x16x128xbf16>
    %13 = vector.shape_cast %12 : vector<1x16x16x128xbf16> to vector<16x16x128xbf16>
    %c0_8 = arith.constant 0 : index
    %c0_9 = arith.constant 0 : index
    %c0_10 = arith.constant 0 : index
    %c0_11 = arith.constant 0 : index
    %14 = vector.load %arg4[%c0_8, %c0_9, %c0_10, %c0_11] : memref<1x1x16x128xbf16, #tpu.memory_space<vmem>>, vector<1x1x16x128xbf16>
    %15 = vector.shape_cast %14 : vector<1x1x16x128xbf16> to vector<1x16x128xbf16>
    %16 = vector.broadcast %7 : bf16 to vector<1x16x128xbf16>
    %17 = arith.mulf %15, %16 : vector<1x16x128xbf16>
    %18 = tpu.concatenate %11, %13, %17 in 0 : vector<1x16x128xbf16>, vector<16x16x128xbf16>, vector<1x16x128xbf16> -> vector<18x16x128xbf16>
    %19 = vector.shape_cast %18 : vector<18x16x128xbf16> to vector<288x128xbf16>
    %c0_12 = arith.constant 0 : index
    %c0_13 = arith.constant 0 : index
    %20 = vector.load %arg5[%c0_12, %c0_13] : memref<128x896xbf16, #tpu.memory_space<vmem>>, vector<128x896xbf16>
    %cst = arith.constant dense<0.000000e+00> : vector<288x896xf32>
    %21 = tpu.matmul %19, %20, %cst {dimension_numbers = #tpu.dot_dimension_numbers<[1], [0], [0], [1], [0, 0, 1, 1], [], []>} : vector<288x128xbf16>, vector<128x896xbf16>, vector<288x896xf32> -> vector<288x896xf32>
    %22 = vector.shape_cast %21 : vector<288x896xf32> to vector<18x16x896xf32>
    %23 = vector.extract_strided_slice %22 {offsets = [0, 0, 0], sizes = [16, 16, 128], strides = [1, 1, 1]} : vector<18x16x896xf32> to vector<16x16x128xf32>
    %24 = vector.extract_strided_slice %22 {offsets = [1, 0, 128], sizes = [16, 16, 128], strides = [1, 1, 1]} : vector<18x16x896xf32> to vector<16x16x128xf32>
    %25 = arith.addf %23, %24 : vector<16x16x128xf32>
    %26 = vector.extract_strided_slice %22 {offsets = [2, 0, 256], sizes = [16, 16, 128], strides = [1, 1, 1]} : vector<18x16x896xf32> to vector<16x16x128xf32>
    %27 = arith.addf %25, %26 : vector<16x16x128xf32>
    %c0_14 = arith.constant 0 : index
    %c0_15 = arith.constant 0 : index
    %c0_16 = arith.constant 0 : index
    %c0_17 = arith.constant 0 : index
    %28 = vector.load %arg6[%c0_14, %c0_15, %c0_16, %c0_17] : memref<3x1x1x128xf32, #tpu.memory_space<vmem>>, vector<1x1x1x128xf32>
    %29 = vector.shape_cast %28 : vector<1x1x1x128xf32> to vector<1x1x128xf32>
    %30 = vector.broadcast %29 : vector<1x1x128xf32> to vector<16x16x128xf32>
    %31 = arith.addf %27, %30 : vector<16x16x128xf32>
    %32 = vector.extract_strided_slice %22 {offsets = [1, 0, 384], sizes = [16, 16, 128], strides = [1, 1, 1]} : vector<18x16x896xf32> to vector<16x16x128xf32>
    %33 = vector.extract_strided_slice %22 {offsets = [1, 0, 512], sizes = [16, 16, 128], strides = [1, 1, 1]} : vector<18x16x896xf32> to vector<16x16x128xf32>
    %34 = vector.extract_strided_slice %22 {offsets = [1, 0, 640], sizes = [16, 16, 128], strides = [1, 1, 1]} : vector<18x16x896xf32> to vector<16x16x128xf32>
    %c1 = arith.constant 1 : index
    %c0_18 = arith.constant 0 : index
    %c0_19 = arith.constant 0 : index
    %c0_20 = arith.constant 0 : index
    %35 = vector.load %arg6[%c1, %c0_18, %c0_19, %c0_20] : memref<3x1x1x128xf32, #tpu.memory_space<vmem>>, vector<1x1x1x128xf32>
    %36 = vector.shape_cast %35 : vector<1x1x1x128xf32> to vector<1x1x128xf32>
    %37 = vector.extract_strided_slice %33 {offsets = [0, 0, 0], sizes = [16, 1, 128], strides = [1, 1, 1]} : vector<16x16x128xf32> to vector<16x1x128xf32>
    %38 = vector.extract_strided_slice %34 {offsets = [0, 1, 0], sizes = [16, 1, 128], strides = [1, 1, 1]} : vector<16x16x128xf32> to vector<16x1x128xf32>
    %39 = arith.addf %37, %38 : vector<16x1x128xf32>
    %40 = vector.broadcast %36 : vector<1x1x128xf32> to vector<16x1x128xf32>
    %41 = arith.addf %39, %40 : vector<16x1x128xf32>
    %42 = vector.extract_strided_slice %33 {offsets = [0, 1, 0], sizes = [16, 14, 128], strides = [1, 1, 1]} : vector<16x16x128xf32> to vector<16x14x128xf32>
    %43 = vector.extract_strided_slice %32 {offsets = [0, 0, 0], sizes = [16, 14, 128], strides = [1, 1, 1]} : vector<16x16x128xf32> to vector<16x14x128xf32>
    %44 = arith.addf %42, %43 : vector<16x14x128xf32>
    %45 = vector.extract_strided_slice %34 {offsets = [0, 2, 0], sizes = [16, 14, 128], strides = [1, 1, 1]} : vector<16x16x128xf32> to vector<16x14x128xf32>
    %46 = arith.addf %44, %45 : vector<16x14x128xf32>
    %47 = vector.broadcast %36 : vector<1x1x128xf32> to vector<16x14x128xf32>
    %48 = arith.addf %46, %47 : vector<16x14x128xf32>
    %49 = vector.extract_strided_slice %33 {offsets = [0, 15, 0], sizes = [16, 1, 128], strides = [1, 1, 1]} : vector<16x16x128xf32> to vector<16x1x128xf32>
    %50 = vector.extract_strided_slice %32 {offsets = [0, 14, 0], sizes = [16, 1, 128], strides = [1, 1, 1]} : vector<16x16x128xf32> to vector<16x1x128xf32>
    %51 = arith.addf %49, %50 : vector<16x1x128xf32>
    %52 = vector.broadcast %36 : vector<1x1x128xf32> to vector<16x1x128xf32>
    %53 = arith.addf %51, %52 : vector<16x1x128xf32>
    %54 = tpu.concatenate %41, %48, %53 in 1 : vector<16x1x128xf32>, vector<16x14x128xf32>, vector<16x1x128xf32> -> vector<16x16x128xf32>
    %55 = vector.extract_strided_slice %22 {offsets = [1, 0, 768], sizes = [16, 16, 128], strides = [1, 1, 1]} : vector<18x16x896xf32> to vector<16x16x128xf32>
    %c2 = arith.constant 2 : index
    %c0_21 = arith.constant 0 : index
    %c0_22 = arith.constant 0 : index
    %c0_23 = arith.constant 0 : index
    %56 = vector.load %arg6[%c2, %c0_21, %c0_22, %c0_23] : memref<3x1x1x128xf32, #tpu.memory_space<vmem>>, vector<1x1x1x128xf32>
    %57 = vector.shape_cast %56 : vector<1x1x1x128xf32> to vector<1x1x128xf32>
    %58 = vector.broadcast %57 : vector<1x1x128xf32> to vector<16x16x128xf32>
    %59 = arith.addf %55, %58 : vector<16x16x128xf32>
    %60 = arith.truncf %31 : vector<16x16x128xf32> to vector<16x16x128xbf16>
    %61 = arith.negf %60 : vector<16x16x128xbf16>
    %62 = math.exp %61 : vector<16x16x128xbf16>
    %cst_24 = arith.constant 1.000000e+00 : bf16
    %63 = vector.broadcast %cst_24 : bf16 to vector<16x16x128xbf16>
    %64 = arith.addf %63, %62 : vector<16x16x128xbf16>
    %65 = arith.divf %63, %64 : vector<16x16x128xbf16>
    %66 = arith.extf %65 : vector<16x16x128xbf16> to vector<16x16x128xf32>
    %67 = arith.truncf %54 : vector<16x16x128xf32> to vector<16x16x128xbf16>
    %68 = arith.negf %67 : vector<16x16x128xbf16>
    %69 = math.exp %68 : vector<16x16x128xbf16>
    %cst_25 = arith.constant 1.000000e+00 : bf16
    %70 = vector.broadcast %cst_25 : bf16 to vector<16x16x128xbf16>
    %71 = arith.addf %70, %69 : vector<16x16x128xbf16>
    %72 = arith.divf %70, %71 : vector<16x16x128xbf16>
    %73 = arith.extf %72 : vector<16x16x128xbf16> to vector<16x16x128xf32>
    %74 = arith.addf %66, %73 : vector<16x16x128xf32>
    %75 = arith.truncf %59 : vector<16x16x128xf32> to vector<16x16x128xbf16>
    %76 = arith.negf %75 : vector<16x16x128xbf16>
    %77 = math.exp %76 : vector<16x16x128xbf16>
    %cst_26 = arith.constant 1.000000e+00 : bf16
    %78 = vector.broadcast %cst_26 : bf16 to vector<16x16x128xbf16>
    %79 = arith.addf %78, %77 : vector<16x16x128xbf16>
    %80 = arith.divf %78, %79 : vector<16x16x128xbf16>
    %81 = arith.extf %80 : vector<16x16x128xbf16> to vector<16x16x128xf32>
    %82 = arith.addf %74, %81 : vector<16x16x128xf32>
    %c0_27 = arith.constant 0 : index
    %c0_28 = arith.constant 0 : index
    %c0_29 = arith.constant 0 : index
    %c0_30 = arith.constant 0 : index
    %83 = vector.load %arg2[%c0_27, %c0_28, %c0_29, %c0_30] : memref<1x16x16x128xbf16, #tpu.memory_space<vmem>>, vector<1x16x16x128xbf16>
    %84 = vector.shape_cast %83 : vector<1x16x16x128xbf16> to vector<16x16x128xbf16>
    %85 = arith.extf %84 : vector<16x16x128xbf16> to vector<16x16x128xf32>
    %86 = arith.mulf %82, %85 : vector<16x16x128xf32>
    %87 = arith.truncf %86 : vector<16x16x128xf32> to vector<16x16x128xbf16>
    %c0_31 = arith.constant 0 : index
    %c0_32 = arith.constant 0 : index
    %c0_33 = arith.constant 0 : index
    %c0_34 = arith.constant 0 : index
    %88 = vector.load %arg7[%c0_31, %c0_32, %c0_33, %c0_34] : memref<1x16x16x128xbf16, #tpu.memory_space<vmem>>, vector<1x16x16x128xbf16>
    %89 = vector.shape_cast %88 : vector<1x16x16x128xbf16> to vector<16x16x128xbf16>
    %90 = vector.shape_cast %87 : vector<16x16x128xbf16> to vector<1x16x16x128xbf16>
    tpu.vector_store %arg7[%c0_31, %c0_32, %c0_33, %c0_34], %90 {strides = array<i32>} : memref<1x16x16x128xbf16, #tpu.memory_space<vmem>>, vector<1x16x16x128xbf16>,
    return
  }
  func.func @transform_0(%arg0: i32, %arg1: i32) -> (i32, i32, i32, i32) {
    %c0_i32 = arith.constant 0 : i32
    %c0_i32_0 = arith.constant 0 : i32
    %c0_i32_1 = arith.constant 0 : i32
    return %arg0, %arg1, %c0_i32, %c0_i32_0 : i32, i32, i32, i32
  }
  func.func @transform_1(%arg0: i32, %arg1: i32) -> (i32, i32, i32, i32) {
    %c16_i32 = arith.constant 16 : i32
    %0 = arith.muli %arg1, %c16_i32 : i32
    %c1_i32 = arith.constant 1 : i32
    %1 = arith.subi %0, %c1_i32 : i32
    %c0_i32 = arith.constant 0 : i32
    %2 = arith.maxsi %1, %c0_i32 : i32
    %c0_i32_0 = arith.constant 0 : i32
    %c0_i32_1 = arith.constant 0 : i32
    %c0_i32_2 = arith.constant 0 : i32
    return %arg0, %2, %c0_i32_0, %c0_i32_1 : i32, i32, i32, i32
  }
  func.func @transform_2(%arg0: i32, %arg1: i32) -> (i32, i32, i32, i32) {
    %c1_i32 = arith.constant 1 : i32
    %0 = arith.addi %arg1, %c1_i32 : i32
    %c16_i32 = arith.constant 16 : i32
    %1 = arith.muli %0, %c16_i32 : i32
    %c15_i32 = arith.constant 15 : i32
    %2 = arith.minsi %1, %c15_i32 : i32
    %c0_i32 = arith.constant 0 : i32
    %c0_i32_0 = arith.constant 0 : i32
    %c0_i32_1 = arith.constant 0 : i32
    return %arg0, %2, %c0_i32, %c0_i32_0 : i32, i32, i32, i32
  }
  func.func @transform_3(%arg0: i32, %arg1: i32) -> (i32, i32) {
    %c0_i32 = arith.constant 0 : i32
    %c0_i32_0 = arith.constant 0 : i32
    %c0_i32_1 = arith.constant 0 : i32
    return %c0_i32, %c0_i32_0 : i32, i32
  }
  func.func @transform_4(%arg0: i32, %arg1: i32) -> (i32, i32, i32, i32) {
    %c0_i32 = arith.constant 0 : i32
    %c0_i32_0 = arith.constant 0 : i32
    %c0_i32_1 = arith.constant 0 : i32
    %c0_i32_2 = arith.constant 0 : i32
    %c0_i32_3 = arith.constant 0 : i32
    return %c0_i32, %c0_i32_0, %c0_i32_1, %c0_i32_2 : i32, i32, i32, i32
  }
  func.func @transform_5(%arg0: i32, %arg1: i32) -> (i32, i32, i32, i32) {
    %c0_i32 = arith.constant 0 : i32
    %c0_i32_0 = arith.constant 0 : i32
    %c0_i32_1 = arith.constant 0 : i32
    return %arg0, %arg1, %c0_i32, %c0_i32_0 : i32, i32, i32, i32
  }
}

</mosaic_0001>

<llo_original>
// kernel: recon_block.1
$region0: #{recon_block.1}
  #allocation0 [shape = 'u32[]', space=smem, size = 0x4, offset = 0x4, fixed_abs, tag = 'smem constant byte address 0x4 - core index']
  #allocation1 [shape = 'u32[144,128]{1,0:T(1,128)}', space=vmem, size = 0x12000, scoped, tag = 'internal scratch']
  %s0 = inlined_call_operand.vmem [shape: bf16[2,16,16,128], index: 0, kind: input, shape index: {}, may-alias: {0,1,2}]
  %s1 = inlined_call_operand.vmem [shape: bf16[2,16,16,128], index: 1, kind: input, shape index: {}, may-alias: {0,1,2}]
  %s2 = inlined_call_operand.vmem [shape: bf16[2,16,16,128], index: 2, kind: input, shape index: {}, may-alias: {0,1,2}]
  %s3 = inlined_call_operand.vmem [shape: bf16[128,896], index: 3, kind: input, shape index: {}]
  %s4 = inlined_call_operand.vmem [shape: f32[3,1,1,128], index: 4, kind: input, shape index: {}]
  %s5 = inlined_call_operand.vmem [shape: bf16[2,16,16,128], index: 5, kind: output, shape index: {}]
  %s6 = sld [smem:[#allocation0]]
  $region53: #{recon_block.1} parent=0
    _
  %s8 = ssub.s32 1, %s6
  %s9 = scalar_select 0, %s8, %s6
  loop: start=0, step=1, limit=4
  $region2: #{recon_block.1} parent=0 // loop_pre_header
    _
  $region3: #{recon_block.1} parent=0 // loop_header
    %s11 = sphi 0, %s15
    %p12 = scmp.ge.s32.totalorder %s11, 4
    %s18 = sphi 0, %s30
    %s19 = sphi 0, %s26
    %s20 = sphi 0, %s18
    %s21 = sphi 0, %s19
    %s22 = sphi 0, %s20
    %s23 = sphi 0, %s21
    %s35 = sphi 0, %s37
    %s38 = sphi 0, %s35
    %s39 = sphi 0, %s38
    %s55 = sphi 0, %s39
    %s71 = sphi 0, %s73
    %s74 = sphi 0, %s71
    %s75 = sphi 0, %s74
    %s91 = sphi 0, %s75
    %s107 = sphi 0, %s109
    %s110 = sphi 0, %s107
    %s111 = sphi 0, %s110
    %s127 = sphi 0, %s111
    %s131 = sphi 0, %s131
    %s133 = sphi 0, %s131
    %s134 = sphi 0, %s133
    %s148 = sphi 0, %s134
    %s152 = sphi 0, %s152
    %s154 = sphi 0, %s152
    %s155 = sphi 0, %s154
    %s169 = sphi 0, %s155
    %s177 = sphi 0, %s179
    %s180 = sphi 0, %s177
    %s181 = sphi 0, %s180
    %s197 = sphi 0, %s181
  $region4: #{recon_block.1} parent=0 // loop_header_branch
    %14 = sbr.rel (%p12) target = $region8
  $region5: #{recon_block.1} parent=0 // loop_body
    %s16 = ssub.s32 %s11, 1
    %s17 = ssub.s32 %s11, 2
    %s24 = sadd.s32 1, %s19
    %p25 = scmp.ge.s32.totalorder %s24, 1
    %s26 = scalar_select %p25, 0, %s24
    %s27 = sadd.s32 1, %s18
    %s28 = scalar_select %p25, %s27, %s18
    %p29 = scmp.ge.s32.totalorder %s28, 2
    %s30 = scalar_select %p29, 0, %s28
    %s31 = ssub.s32 %s18, %s30
    %s32 = ssub.s32 %s19, %s26
    %s33 = sor.u32 %s31, %s32
    %p34 = scmp.eq.s32.totalorder %s33, 0
    %s36 = sadd.s32 %s35, 1
    %s37 = scalar_select %p34, %s35, %s36
    %p40 = pneg %p34
    %p41 = scmp.eq.s32.totalorder %s11, 1
    %p42 = por %p40, %p41
    %p43 = scmp.ne.s32.totalorder %s35, %s38
    %p44 = scmp.eq.s32.totalorder %s11, 0
    %p45 = por %p43, %p44
    %p46 = scmp.ne.s32.totalorder %s35, %s38
    %p47 = scmp.eq.s32.totalorder %s16, 1
    %p48 = por %p46, %p47
    %p49 = scmp.ne.s32.totalorder %s38, %s39
    %p50 = scmp.eq.s32.totalorder %s16, 0
    %p51 = por %p49, %p50
    %p52 = scmp.ne.s32.totalorder %s38, %s39
    %p53 = scmp.eq.s32.totalorder %s17, 1
    %p54 = por %p52, %p53
    %p56 = scmp.ne.s32.totalorder %s39, %s55
    %p57 = scmp.eq.s32.totalorder %s17, 0
    %p58 = por %p56, %p57
    %s59 = smul.u32 %s19, 16
    %s60 = ssub.s32 %s59, 1
    %p61 = scmp.gt.s32.totalorder %s60, 0
    %s62 = scalar_select %p61, %s60, 0
    %s63 = smul.u32 %s26, 16
    %s64 = ssub.s32 %s63, 1
    %p65 = scmp.gt.s32.totalorder %s64, 0
    %s66 = scalar_select %p65, %s64, 0
    %s67 = ssub.s32 %s18, %s30
    %s68 = ssub.s32 %s62, %s66
    %s69 = sor.u32 %s67, %s68
    %p70 = scmp.eq.s32.totalorder %s69, 0
    %s72 = sadd.s32 %s71, 1
    %s73 = scalar_select %p70, %s71, %s72
    %p76 = pneg %p70
    %p77 = scmp.eq.s32.totalorder %s11, 1
    %p78 = por %p76, %p77
    %p79 = scmp.ne.s32.totalorder %s71, %s74
    %p80 = scmp.eq.s32.totalorder %s11, 0
    %p81 = por %p79, %p80
    %p82 = scmp.ne.s32.totalorder %s71, %s74
    %p83 = scmp.eq.s32.totalorder %s16, 1
    %p84 = por %p82, %p83
    %p85 = scmp.ne.s32.totalorder %s74, %s75
    %p86 = scmp.eq.s32.totalorder %s16, 0
    %p87 = por %p85, %p86
    %p88 = scmp.ne.s32.totalorder %s74, %s75
    %p89 = scmp.eq.s32.totalorder %s17, 1
    %p90 = por %p88, %p89
    %p92 = scmp.ne.s32.totalorder %s75, %s91
    %p93 = scmp.eq.s32.totalorder %s17, 0
    %p94 = por %p92, %p93
    %s95 = sadd.s32 %s19, 1
    %s96 = smul.u32 %s95, 16
    %p97 = scmp.lt.s32.totalorder %s96, 15
    %s98 = scalar_select %p97, %s96, 15
    %s99 = sadd.s32 %s26, 1
    %s100 = smul.u32 %s99, 16
    %p101 = scmp.lt.s32.totalorder %s100, 15
    %s102 = scalar_select %p101, %s100, 15
    %s103 = ssub.s32 %s18, %s30
    %s104 = ssub.s32 %s98, %s102
    %s105 = sor.u32 %s103, %s104
    %p106 = scmp.eq.s32.totalorder %s105, 0
    %s108 = sadd.s32 %s107, 1
    %s109 = scalar_select %p106, %s107, %s108
    %p112 = pneg %p106
    %p113 = scmp.eq.s32.totalorder %s11, 1
    %p114 = por %p112, %p113
    %p115 = scmp.ne.s32.totalorder %s107, %s110
    %p116 = scmp.eq.s32.totalorder %s11, 0
    %p117 = por %p115, %p116
    %p118 = scmp.ne.s32.totalorder %s107, %s110
    %p119 = scmp.eq.s32.totalorder %s16, 1
    %p120 = por %p118, %p119
    %p121 = scmp.ne.s32.totalorder %s110, %s111
    %p122 = scmp.eq.s32.totalorder %s16, 0
    %p123 = por %p121, %p122
    %p124 = scmp.ne.s32.totalorder %s110, %s111
    %p125 = scmp.eq.s32.totalorder %s17, 1
    %p126 = por %p124, %p125
    %p128 = scmp.ne.s32.totalorder %s111, %s127
    %p129 = scmp.eq.s32.totalorder %s17, 0
    %p130 = por %p128, %p129
    %s132 = sadd.s32 %s131, 1
    %p135 = scmp.eq.s32.totalorder %s11, 1
    %p136 = scmp.ne.s32.totalorder %s131, %s133
    %p137 = scmp.eq.s32.totalorder %s11, 0
    %p138 = por %p136, %p137
    %p139 = scmp.ne.s32.totalorder %s131, %s133
    %p140 = scmp.eq.s32.totalorder %s16, 1
    %p141 = por %p139, %p140
    %p142 = scmp.ne.s32.totalorder %s133, %s134
    %p143 = scmp.eq.s32.totalorder %s16, 0
    %p144 = por %p142, %p143
    %p145 = scmp.ne.s32.totalorder %s133, %s134
    %p146 = scmp.eq.s32.totalorder %s17, 1
    %p147 = por %p145, %p146
    %p149 = scmp.ne.s32.totalorder %s134, %s148
    %p150 = scmp.eq.s32.totalorder %s17, 0
    %p151 = por %p149, %p150
    %s153 = sadd.s32 %s152, 1
    %p156 = scmp.eq.s32.totalorder %s11, 1
    %p157 = scmp.ne.s32.totalorder %s152, %s154
    %p158 = scmp.eq.s32.totalorder %s11, 0
    %p159 = por %p157, %p158
    %p160 = scmp.ne.s32.totalorder %s152, %s154
    %p161 = scmp.eq.s32.totalorder %s16, 1
    %p162 = por %p160, %p161
    %p163 = scmp.ne.s32.totalorder %s154, %s155
    %p164 = scmp.eq.s32.totalorder %s16, 0
    %p165 = por %p163, %p164
    %p166 = scmp.ne.s32.totalorder %s154, %s155
    %p167 = scmp.eq.s32.totalorder %s17, 1
    %p168 = por %p166, %p167
    %p170 = scmp.ne.s32.totalorder %s155, %s169
    %p171 = scmp.eq.s32.totalorder %s17, 0
    %p172 = por %p170, %p171
    %s173 = ssub.s32 %s18, %s30
    %s174 = ssub.s32 %s19, %s26
    %s175 = sor.u32 %s173, %s174
    %p176 = scmp.eq.s32.totalorder %s175, 0
    %s178 = sadd.s32 %s177, 1
    %s179 = scalar_select %p176, %s177, %s178
    %p182 = pneg %p176
    %p183 = scmp.eq.s32.totalorder %s11, 1
    %p184 = por %p182, %p183
    %p185 = scmp.ne.s32.totalorder %s177, %s180
    %p186 = scmp.eq.s32.totalorder %s11, 0
    %p187 = por %p185, %p186
    %p188 = scmp.ne.s32.totalorder %s177, %s180
    %p189 = scmp.eq.s32.totalorder %s16, 1
    %p190 = por %p188, %p189
    %p191 = scmp.ne.s32.totalorder %s180, %s181
    %p192 = scmp.eq.s32.totalorder %s16, 0
    %p193 = por %p191, %p192
    %p194 = scmp.ne.s32.totalorder %s180, %s181
    %p195 = scmp.eq.s32.totalorder %s17, 1
    %p196 = por %p194, %p195
    %p198 = scmp.ne.s32.totalorder %s181, %s197
    %p199 = scmp.eq.s32.totalorder %s17, 0
    %p200 = por %p198, %p199
    %p201 = scmp.le.s32.totalorder 1, %s11
    %p202 = scmp.lt.s32.totalorder %s11, 3
    %p203 = pnand %p201, %p202
    %p204 = pneg %p203
    // Predicated region
    $region9: #{recon_block.1} parent=5 // pred_check
      _
    $region10: #{recon_block.1} parent=5 // pred_check_branch
      %206 = sbr.rel (%p203) target = $region12
    $region11: #{recon_block.1} parent=5 // pred_region
      %s207 = ssub.s32 %s11, 1
      // Predicated region
      $region13: #{recon_block.1} parent=11 // pred_check
        %p208 = pneg %p144
      $region14: #{recon_block.1} parent=11 // pred_check_branch
        %210 = sbr.rel (%p208) target = $region16
      $region15: #{recon_block.1} parent=11 // pred_region
        _
      $region16: #{recon_block.1} parent=11 // pred_fallthru
        _
      // Predicated region
      $region17: #{recon_block.1} parent=11 // pred_check
        %p211 = pneg %p165
      $region18: #{recon_block.1} parent=11 // pred_check_branch
        %213 = sbr.rel (%p211) target = $region20
      $region19: #{recon_block.1} parent=11 // pred_region
        _
      $region20: #{recon_block.1} parent=11 // pred_fallthru
        _
    $region12: #{recon_block.1} parent=5 // pred_fallthru
      _
    %p214 = scmp.lt.s32.totalorder %s11, 2
    // Predicated region
    $region21: #{recon_block.1} parent=5 // pred_check
      %p215 = pneg %p214
    $region22: #{recon_block.1} parent=5 // pred_check_branch
      %217 = sbr.rel (%p215) target = $region24
    $region23: #{recon_block.1} parent=5 // pred_region
      // Predicated region
      $region25: #{recon_block.1} parent=23 // pred_check
        %p218 = pneg %p45
      $region26: #{recon_block.1} parent=23 // pred_check_branch
        %220 = sbr.rel (%p218) target = $region28
      $region27: #{recon_block.1} parent=23 // pred_region
        %s221 = smul.u32 16, %s19
        %p222 = scmp.lt.s32.totalorder %s18, 1
        %s223 = scalar_select %p222, %s18, 1
        %p224 = scmp.lt.s32.totalorder %s221, 15
        %s225 = scalar_select %p224, %s221, 15
        %s226 = smul.addr %s225, 2
        %s227 = smul.addr %s223, 32
        %s228 = sadd.s32 %s226, %s227
        %s229 = smul.addr %s228, 4
        %s230 = scalar_lea.vmem %s0, %s229
        %s231 = smul.u32 16, %s19
      $region28: #{recon_block.1} parent=23 // pred_fallthru
        _
      // Predicated region
      $region29: #{recon_block.1} parent=23 // pred_check
        %p232 = pneg %p81
      $region30: #{recon_block.1} parent=23 // pred_check_branch
        %234 = sbr.rel (%p232) target = $region32
      $region31: #{recon_block.1} parent=23 // pred_region
        %s235 = smul.u32 %s19, 16
        %s236 = ssub.s32 %s235, 1
        %p237 = scmp.gt.s32.totalorder %s236, 0
        %s238 = scalar_select %p237, %s236, 0
        %p239 = scmp.lt.s32.totalorder %s18, 1
        %s240 = scalar_select %p239, %s18, 1
        %p241 = scmp.lt.s32.totalorder %s238, 15
        %s242 = scalar_select %p241, %s238, 15
        %s243 = smul.addr %s242, 2
        %s244 = smul.addr %s240, 32
        %s245 = sadd.s32 %s243, %s244
        %s246 = smul.addr %s245, 4
        %s247 = scalar_lea.vmem %s1, %s246
        %s248 = smul.u32 %s19, 16
        %s249 = ssub.s32 %s248, 1
        %p250 = scmp.gt.s32.totalorder %s249, 0
        %s251 = scalar_select %p250, %s249, 0
      $region32: #{recon_block.1} parent=23 // pred_fallthru
        _
      // Predicated region
      $region33: #{recon_block.1} parent=23 // pred_check
        %p252 = pneg %p117
      $region34: #{recon_block.1} parent=23 // pred_check_branch
        %254 = sbr.rel (%p252) target = $region36
      $region35: #{recon_block.1} parent=23 // pred_region
        %s255 = sadd.s32 %s19, 1
        %s256 = smul.u32 %s255, 16
        %p257 = scmp.lt.s32.totalorder %s256, 15
        %s258 = scalar_select %p257, %s256, 15
        %p259 = scmp.lt.s32.totalorder %s18, 1
        %s260 = scalar_select %p259, %s18, 1
        %p261 = scmp.lt.s32.totalorder %s258, 15
        %s262 = scalar_select %p261, %s258, 15
        %s263 = smul.addr %s262, 2
        %s264 = smul.addr %s260, 32
        %s265 = sadd.s32 %s263, %s264
        %s266 = smul.addr %s265, 4
        %s267 = scalar_lea.vmem %s2, %s266
        %s268 = sadd.s32 %s19, 1
        %s269 = smul.u32 %s268, 16
        %p270 = scmp.lt.s32.totalorder %s269, 15
        %s271 = scalar_select %p270, %s269, 15
      $region36: #{recon_block.1} parent=23 // pred_fallthru
        _
    $region24: #{recon_block.1} parent=5 // pred_fallthru
      _
    %p272 = scmp.le.s32.totalorder 1, %s11
    %p273 = scmp.lt.s32.totalorder %s11, 3
    %p274 = pnand %p272, %p273
    %p275 = pneg %p274
    // Predicated region
    $region37: #{recon_block.1} parent=5 // pred_check
      _
    $region38: #{recon_block.1} parent=5 // pred_check_branch
      %277 = sbr.rel (%p274) target = $region40
    $region39: #{recon_block.1} parent=5 // pred_region
      %s278 = ssub.s32 %s11, 1
      %s279 = smul.u32 16, %s21
      %p280 = scmp.lt.s32.totalorder %s20, 1
      %s281 = scalar_select %p280, %s20, 1
      %p282 = scmp.lt.s32.totalorder %s279, 15
      %s283 = scalar_select %p282, %s279, 15
      %s284 = smul.addr %s283, 2
      %s285 = smul.addr %s281, 32
      %s286 = sadd.s32 %s284, %s285
      %s287 = smul.addr %s286, 4
      %s288 = scalar_lea.vmem %s0, %s287
      %p289 = pneg %p51
      %p290 = pneg %p48
      %s291 = smul.u32 %s21, 16
      %s292 = ssub.s32 %s291, 1
      %p293 = scmp.gt.s32.totalorder %s292, 0
      %s294 = scalar_select %p293, %s292, 0
      %p295 = scmp.lt.s32.totalorder %s20, 1
      %s296 = scalar_select %p295, %s20, 1
      %p297 = scmp.lt.s32.totalorder %s294, 15
      %s298 = scalar_select %p297, %s294, 15
      %s299 = smul.addr %s298, 2
      %s300 = smul.addr %s296, 32
      %s301 = sadd.s32 %s299, %s300
      %s302 = smul.addr %s301, 4
      %s303 = scalar_lea.vmem %s1, %s302
      %p304 = pneg %p87
      %p305 = pneg %p84
      %s306 = sadd.s32 %s21, 1
      %s307 = smul.u32 %s306, 16
      %p308 = scmp.lt.s32.totalorder %s307, 15
      %s309 = scalar_select %p308, %s307, 15
      %p310 = scmp.lt.s32.totalorder %s20, 1
      %s311 = scalar_select %p310, %s20, 1
      %p312 = scmp.lt.s32.totalorder %s309, 15
      %s313 = scalar_select %p312, %s309, 15
      %s314 = smul.addr %s313, 2
      %s315 = smul.addr %s311, 32
      %s316 = sadd.s32 %s314, %s315
      %s317 = smul.addr %s316, 4
      %s318 = scalar_lea.vmem %s2, %s317
      %p319 = pneg %p123
      %p320 = pneg %p120
      %p321 = pneg %p144
      %p322 = pneg %p141
      %p323 = pneg %p165
      %p324 = pneg %p162
      %p325 = pneg %p193
      %p326 = pneg %p190
      %s327 = smul.u32 16, %s21
      %p328 = scmp.lt.s32.totalorder %s20, 1
      %s329 = scalar_select %p328, %s20, 1
      %p330 = scmp.lt.s32.totalorder %s327, 15
      %s331 = scalar_select %p330, %s327, 15
      %s332 = smul.addr %s331, 2
      %s333 = smul.addr %s329, 32
      %s334 = sadd.s32 %s332, %s333
      %s335 = smul.addr %s334, 4
      %s336 = scalar_lea.vmem %s5, %s335
      %s337 = smul.u32 16, %s21
      %p338 = scmp.lt.s32.totalorder %s20, 1
      %s339 = scalar_select %p338, %s20, 1
      %p340 = scmp.lt.s32.totalorder %s337, 15
      %s341 = scalar_select %p340, %s337, 15
      %s342 = smul.addr %s341, 2
      %s343 = smul.addr %s339, 32
      %s344 = sadd.s32 %s342, %s343
      %s345 = smul.addr %s344, 4
      %s346 = scalar_lea.vmem %s0, %s345
      %s347 = smul.u32 16, %s21
      %s348 = smul.u32 %s21, 16
      %s349 = ssub.s32 %s348, 1
      %p350 = scmp.gt.s32.totalorder %s349, 0
      %s351 = scalar_select %p350, %s349, 0
      %p352 = scmp.lt.s32.totalorder %s20, 1
      %s353 = scalar_select %p352, %s20, 1
      %p354 = scmp.lt.s32.totalorder %s351, 15
      %s355 = scalar_select %p354, %s351, 15
      %s356 = smul.addr %s355, 2
      %s357 = smul.addr %s353, 32
      %s358 = sadd.s32 %s356, %s357
      %s359 = smul.addr %s358, 4
      %s360 = scalar_lea.vmem %s1, %s359
      %s361 = smul.u32 %s21, 16
      %s362 = ssub.s32 %s361, 1
      %p363 = scmp.gt.s32.totalorder %s362, 0
      %s364 = scalar_select %p363, %s362, 0
      %s365 = sadd.s32 %s21, 1
      %s366 = smul.u32 %s365, 16
      %p367 = scmp.lt.s32.totalorder %s366, 15
      %s368 = scalar_select %p367, %s366, 15
      %p369 = scmp.lt.s32.totalorder %s20, 1
      %s370 = scalar_select %p369, %s20, 1
      %p371 = scmp.lt.s32.totalorder %s368, 15
      %s372 = scalar_select %p371, %s368, 15
      %s373 = smul.addr %s372, 2
      %s374 = smul.addr %s370, 32
      %s375 = sadd.s32 %s373, %s374
      %s376 = smul.addr %s375, 4
      %s377 = scalar_lea.vmem %s2, %s376
      %s378 = sadd.s32 %s21, 1
      %s379 = smul.u32 %s378, 16
      %p380 = scmp.lt.s32.totalorder %s379, 15
      %s381 = scalar_select %p380, %s379, 15
      %s382 = smul.u32 16, %s21
      %p383 = scmp.lt.s32.totalorder %s20, 1
      %s384 = scalar_select %p383, %s20, 1
      %p385 = scmp.lt.s32.totalorder %s382, 15
      %s386 = scalar_select %p385, %s382, 15
      %s387 = smul.addr %s386, 2
      %s388 = smul.addr %s384, 32
      %s389 = sadd.s32 %s387, %s388
      %s390 = smul.addr %s389, 4
      %s391 = scalar_lea.vmem %s5, %s390
      %s392 = smul.u32 16, %s21
      %p395 = scmp.gt.s32.totalorder %s21, 0
      %s396 = scalar_select %p395, 1, 0
      %s397 = scvt.s32.f32 %s396
      %p399 = scmp.ne.f32.partialorder %s397, %s397
      %s400 = sshrl.u32 %s397, 16
      %s401 = sand.u32 %s400, 1
      %s402 = sadd.s32 32767, %s401
      %s403 = sadd.s32 %s397, %s402
      %s404 = sand.u32 %s403, 4294901760
      %s405 = scalar_select %p399, 2143289344, %s404
      %s407 = sshrl.u32 %s405, 16
      %p408 = scmp.lt.s32.totalorder %s21, 0
      %s409 = scalar_select %p408, 1, 0
      %s410 = scvt.s32.f32 %s409
      %p412 = scmp.ne.f32.partialorder %s410, %s410
      %s413 = sshrl.u32 %s410, 16
      %s414 = sand.u32 %s413, 1
      %s415 = sadd.s32 32767, %s414
      %s416 = sadd.s32 %s410, %s415
      %s417 = sand.u32 %s416, 4294901760
      %s418 = scalar_select %p412, 2143289344, %s417
      %s420 = sshrl.u32 %s418, 16
      %v421 = vld [vmem:[%s360] sm:$0xf]
      %v422 = vld [vmem:[%s360 + $0x4] sm:$0xf]
      %s423 = sshll.u32 %s407, 16
      %s424 = sor.u32 %s407, %s423
      %v425 = vstv %s424
      %v427 = vmul.bf16 %v421, %v425
      %v428 = vmul.bf16 %v422, %v425
      %v429 = vld [vmem:[%s346] sm:$0xf]
      %v430 = vld [vmem:[%s346 + $0x4] sm:$0xf]
      %v431 = vld [vmem:[%s346 + $0x8] sm:$0xf]
      %v432 = vld [vmem:[%s346 + $0xc] sm:$0xf]
      %v433 = vld [vmem:[%s346 + $0x10] sm:$0xf]
      %v434 = vld [vmem:[%s346 + $0x14] sm:$0xf]
      %v435 = vld [vmem:[%s346 + $0x18] sm:$0xf]
      %v436 = vld [vmem:[%s346 + $0x1c] sm:$0xf]
      %v437 = vld [vmem:[%s346 + $0x20] sm:$0xf]
      %v438 = vld [vmem:[%s346 + $0x24] sm:$0xf]
      %v439 = vld [vmem:[%s346 + $0x28] sm:$0xf]
      %v440 = vld [vmem:[%s346 + $0x2c] sm:$0xf]
      %v441 = vld [vmem:[%s346 + $0x30] sm:$0xf]
      %v442 = vld [vmem:[%s346 + $0x34] sm:$0xf]
      %v443 = vld [vmem:[%s346 + $0x38] sm:$0xf]
      %v444 = vld [vmem:[%s346 + $0x3c] sm:$0xf]
      %v445 = vld [vmem:[%s346 + $0x40] sm:$0xf]
      %v446 = vld [vmem:[%s346 + $0x44] sm:$0xf]
      %v447 = vld [vmem:[%s346 + $0x48] sm:$0xf]
      %v448 = vld [vmem:[%s346 + $0x4c] sm:$0xf]
      %v449 = vld [vmem:[%s346 + $0x50] sm:$0xf]
      %v450 = vld [vmem:[%s346 + $0x54] sm:$0xf]
      %v451 = vld [vmem:[%s346 + $0x58] sm:$0xf]
      %v452 = vld [vmem:[%s346 + $0x5c] sm:$0xf]
      %v453 = vld [vmem:[%s346 + $0x60] sm:$0xf]
      %v454 = vld [vmem:[%s346 + $0x64] sm:$0xf]
      %v455 = vld [vmem:[%s346 + $0x68] sm:$0xf]
      %v456 = vld [vmem:[%s346 + $0x6c] sm:$0xf]
      %v457 = vld [vmem:[%s346 + $0x70] sm:$0xf]
      %v458 = vld [vmem:[%s346 + $0x74] sm:$0xf]
      %v459 = vld [vmem:[%s346 + $0x78] sm:$0xf]
      %v460 = vld [vmem:[%s346 + $0x7c] sm:$0xf]
      %v461 = vld [vmem:[%s377] sm:$0xf]
      %v462 = vld [vmem:[%s377 + $0x4] sm:$0xf]
      %s463 = sshll.u32 %s420, 16
      %s464 = sor.u32 %s420, %s463
      %v465 = vstv %s464
      %v467 = vmul.bf16 %v461, %v465
      %v468 = vmul.bf16 %v462, %v465
      %v469 = vld [vmem:[%s3] sm:$0xff]
      %v470 = vld [vmem:[%s3 + $0x8] sm:$0xff]
      %v471 = vld [vmem:[%s3 + $0x10] sm:$0xff]
      %v472 = vld [vmem:[%s3 + $0x18] sm:$0xf]
      %v473 = vld [vmem:[%s3 + $0x1c] sm:$0xff]
      %v474 = vld [vmem:[%s3 + $0x24] sm:$0xff]
      %v475 = vld [vmem:[%s3 + $0x2c] sm:$0xff]
      %v476 = vld [vmem:[%s3 + $0x34] sm:$0xf]
      %v477 = vld [vmem:[%s3 + $0x38] sm:$0xff]
      %v478 = vld [vmem:[%s3 + $0x40] sm:$0xff]
      %v479 = vld [vmem:[%s3 + $0x48] sm:$0xff]
      %v480 = vld [vmem:[%s3 + $0x50] sm:$0xf]
      %v481 = vld [vmem:[%s3 + $0x54] sm:$0xff]
      %v482 = vld [vmem:[%s3 + $0x5c] sm:$0xff]
      %v483 = vld [vmem:[%s3 + $0x64] sm:$0xff]
      %v484 = vld [vmem:[%s3 + $0x6c] sm:$0xf]
      %v485 = vld [vmem:[%s3 + $0x70] sm:$0xff]
      %v486 = vld [vmem:[%s3 + $0x78] sm:$0xff]
      %v487 = vld [vmem:[%s3 + $0x80] sm:$0xff]
      %v488 = vld [vmem:[%s3 + $0x88] sm:$0xf]
      %v489 = vld [vmem:[%s3 + $0x8c] sm:$0xff]
      %v490 = vld [vmem:[%s3 + $0x94] sm:$0xff]
      %v491 = vld [vmem:[%s3 + $0x9c] sm:$0xff]
      %v492 = vld [vmem:[%s3 + $0xa4] sm:$0xf]
      %v493 = vld [vmem:[%s3 + $0xa8] sm:$0xff]
      %v494 = vld [vmem:[%s3 + $0xb0] sm:$0xff]
      %v495 = vld [vmem:[%s3 + $0xb8] sm:$0xff]
      %v496 = vld [vmem:[%s3 + $0xc0] sm:$0xf]
      %v497 = vld [vmem:[%s3 + $0xc4] sm:$0xff]
      %v498 = vld [vmem:[%s3 + $0xcc] sm:$0xff]
      %v499 = vld [vmem:[%s3 + $0xd4] sm:$0xff]
      %v500 = vld [vmem:[%s3 + $0xdc] sm:$0xf]
      %v501 = vld [vmem:[%s3 + $0xe0] sm:$0xff]
      %v502 = vld [vmem:[%s3 + $0xe8] sm:$0xff]
      %v503 = vld [vmem:[%s3 + $0xf0] sm:$0xff]
      %v504 = vld [vmem:[%s3 + $0xf8] sm:$0xf]
      %v505 = vld [vmem:[%s3 + $0xfc] sm:$0xff]
      %v506 = vld [vmem:[%s3 + $0x104] sm:$0xff]
      %v507 = vld [vmem:[%s3 + $0x10c] sm:$0xff]
      %v508 = vld [vmem:[%s3 + $0x114] sm:$0xf]
      %v509 = vld [vmem:[%s3 + $0x118] sm:$0xff]
      %v510 = vld [vmem:[%s3 + $0x120] sm:$0xff]
      %v511 = vld [vmem:[%s3 + $0x128] sm:$0xff]
      %v512 = vld [vmem:[%s3 + $0x130] sm:$0xf]
      %v513 = vld [vmem:[%s3 + $0x134] sm:$0xff]
      %v514 = vld [vmem:[%s3 + $0x13c] sm:$0xff]
      %v515 = vld [vmem:[%s3 + $0x144] sm:$0xff]
      %v516 = vld [vmem:[%s3 + $0x14c] sm:$0xf]
      %v517 = vld [vmem:[%s3 + $0x150] sm:$0xff]
      %v518 = vld [vmem:[%s3 + $0x158] sm:$0xff]
      %v519 = vld [vmem:[%s3 + $0x160] sm:$0xff]
      %v520 = vld [vmem:[%s3 + $0x168] sm:$0xf]
      %v521 = vld [vmem:[%s3 + $0x16c] sm:$0xff]
      %v522 = vld [vmem:[%s3 + $0x174] sm:$0xff]
      %v523 = vld [vmem:[%s3 + $0x17c] sm:$0xff]
      %v524 = vld [vmem:[%s3 + $0x184] sm:$0xf]
      %v525 = vld [vmem:[%s3 + $0x188] sm:$0xff]
      %v526 = vld [vmem:[%s3 + $0x190] sm:$0xff]
      %v527 = vld [vmem:[%s3 + $0x198] sm:$0xff]
      %v528 = vld [vmem:[%s3 + $0x1a0] sm:$0xf]
      %v529 = vld [vmem:[%s3 + $0x1a4] sm:$0xff]
      %v530 = vld [vmem:[%s3 + $0x1ac] sm:$0xff]
      %v531 = vld [vmem:[%s3 + $0x1b4] sm:$0xff]
      %v532 = vld [vmem:[%s3 + $0x1bc] sm:$0xf]
      %v569 = vunpack.c.l.b16 %v427
      %v570 = vunpack.c.l.b16 %v428
      %v571 = vunpack.c.l.b16 %v429
      %v572 = vunpack.c.l.b16 %v430
      %v573 = vunpack.c.l.b16 %v431
      %v574 = vunpack.c.l.b16 %v432
      %v575 = vunpack.c.l.b16 %v433
      %v576 = vunpack.c.l.b16 %v434
      %v577 = vunpack.c.l.b16 %v435
      %v578 = vunpack.c.l.b16 %v436
      %v579 = vunpack.c.l.b16 %v437
      %v580 = vunpack.c.l.b16 %v438
      %v581 = vunpack.c.l.b16 %v439
      %v582 = vunpack.c.l.b16 %v440
      %v583 = vunpack.c.l.b16 %v441
      %v584 = vunpack.c.l.b16 %v442
      %v585 = vunpack.c.l.b16 %v443
      %v586 = vunpack.c.l.b16 %v444
      %v587 = vunpack.c.l.b16 %v445
      %v588 = vunpack.c.l.b16 %v446
      %v589 = vunpack.c.l.b16 %v447
      %v590 = vunpack.c.l.b16 %v448
      %v591 = vunpack.c.l.b16 %v449
      %v592 = vunpack.c.l.b16 %v450
      %v593 = vunpack.c.l.b16 %v451
      %v594 = vunpack.c.l.b16 %v452
      %v595 = vunpack.c.l.b16 %v453
      %v596 = vunpack.c.l.b16 %v454
      %v597 = vunpack.c.l.b16 %v455
      %v598 = vunpack.c.l.b16 %v456
      %v599 = vunpack.c.l.b16 %v457
      %v600 = vunpack.c.l.b16 %v458
      %v601 = vunpack.c.l.b16 %v459
      %v602 = vunpack.c.l.b16 %v460
      %v603 = vunpack.c.l.b16 %v467
      %v604 = vunpack.c.l.b16 %v468
      %v605 = vpack.c.b16 %v570, %v569
      %v606 = vpack.c.b16 %v572, %v571
      %v607 = vpack.c.b16 %v574, %v573
      %v608 = vpack.c.b16 %v576, %v575
      %v609 = vpack.c.b16 %v578, %v577
      %v610 = vpack.c.b16 %v580, %v579
      %v611 = vpack.c.b16 %v582, %v581
      %v612 = vpack.c.b16 %v584, %v583
      %v613 = vpack.c.b16 %v586, %v585
      %v614 = vpack.c.b16 %v588, %v587
      %v615 = vpack.c.b16 %v590, %v589
      %v616 = vpack.c.b16 %v592, %v591
      %v617 = vpack.c.b16 %v594, %v593
      %v618 = vpack.c.b16 %v596, %v595
      %v619 = vpack.c.b16 %v598, %v597
      %v620 = vpack.c.b16 %v600, %v599
      %v621 = vpack.c.b16 %v602, %v601
      %v622 = vpack.c.b16 %v604, %v603
      %v705 = vunpack.c.l.b16 %v469
      %v706 = vunpack.c.h.b16 %v469
      %v707 = vunpack.c.l.b16 %v470
      %v708 = vunpack.c.h.b16 %v470
      %v709 = vunpack.c.l.b16 %v471
      %v710 = vunpack.c.h.b16 %v471
      %v711 = vunpack.c.l.b16 %v472
      %v712 = vunpack.c.l.b16 %v473
      %v713 = vunpack.c.h.b16 %v473
      %v714 = vunpack.c.l.b16 %v474
      %v715 = vunpack.c.h.b16 %v474
      %v716 = vunpack.c.l.b16 %v475
      %v717 = vunpack.c.h.b16 %v475
      %v718 = vunpack.c.l.b16 %v476
      %v719 = vunpack.c.l.b16 %v477
      %v720 = vunpack.c.h.b16 %v477
      %v721 = vunpack.c.l.b16 %v478
      %v722 = vunpack.c.h.b16 %v478
      %v723 = vunpack.c.l.b16 %v479
      %v724 = vunpack.c.h.b16 %v479
      %v725 = vunpack.c.l.b16 %v480
      %v726 = vunpack.c.l.b16 %v481
      %v727 = vunpack.c.h.b16 %v481
      %v728 = vunpack.c.l.b16 %v482
      %v729 = vunpack.c.h.b16 %v482
      %v730 = vunpack.c.l.b16 %v483
      %v731 = vunpack.c.h.b16 %v483
      %v732 = vunpack.c.l.b16 %v484
      %v733 = vunpack.c.l.b16 %v485
      %v734 = vunpack.c.h.b16 %v485
      %v735 = vunpack.c.l.b16 %v486
      %v736 = vunpack.c.h.b16 %v486
      %v737 = vunpack.c.l.b16 %v487
      %v738 = vunpack.c.h.b16 %v487
      %v739 = vunpack.c.l.b16 %v488
      %v740 = vunpack.c.l.b16 %v489
      %v741 = vunpack.c.h.b16 %v489
      %v742 = vunpack.c.l.b16 %v490
      %v743 = vunpack.c.h.b16 %v490
      %v744 = vunpack.c.l.b16 %v491
      %v745 = vunpack.c.h.b16 %v491
      %v746 = vunpack.c.l.b16 %v492
      %v747 = vunpack.c.l.b16 %v493
      %v748 = vunpack.c.h.b16 %v493
      %v749 = vunpack.c.l.b16 %v494
      %v750 = vunpack.c.h.b16 %v494
      %v751 = vunpack.c.l.b16 %v495
      %v752 = vunpack.c.h.b16 %v495
      %v753 = vunpack.c.l.b16 %v496
      %v754 = vunpack.c.l.b16 %v497
      %v755 = vunpack.c.h.b16 %v497
      %v756 = vunpack.c.l.b16 %v498
      %v757 = vunpack.c.h.b16 %v498
      %v758 = vunpack.c.l.b16 %v499
      %v759 = vunpack.c.h.b16 %v499
      %v760 = vunpack.c.l.b16 %v500
      %v761 = vunpack.c.l.b16 %v501
      %v762 = vunpack.c.h.b16 %v501
      %v763 = vunpack.c.l.b16 %v502
      %v764 = vunpack.c.h.b16 %v502
      %v765 = vunpack.c.l.b16 %v503
      %v766 = vunpack.c.h.b16 %v503
      %v767 = vunpack.c.l.b16 %v504
      %v768 = vunpack.c.l.b16 %v505
      %v769 = vunpack.c.h.b16 %v505
      %v770 = vunpack.c.l.b16 %v506
      %v771 = vunpack.c.h.b16 %v506
      %v772 = vunpack.c.l.b16 %v507
      %v773 = vunpack.c.h.b16 %v507
      %v774 = vunpack.c.l.b16 %v508
      %v775 = vunpack.c.l.b16 %v509
      %v776 = vunpack.c.h.b16 %v509
      %v777 = vunpack.c.l.b16 %v510
      %v778 = vunpack.c.h.b16 %v510
      %v779 = vunpack.c.l.b16 %v511
      %v780 = vunpack.c.h.b16 %v511
      %v781 = vunpack.c.l.b16 %v512
      %v782 = vunpack.c.l.b16 %v513
      %v783 = vunpack.c.h.b16 %v513
      %v784 = vunpack.c.l.b16 %v514
      %v785 = vunpack.c.h.b16 %v514
      %v786 = vunpack.c.l.b16 %v515
      %v787 = vunpack.c.h.b16 %v515
      %v788 = vunpack.c.l.b16 %v516
      %v789 = vunpack.c.l.b16 %v517
      %v790 = vunpack.c.h.b16 %v517
      %v791 = vunpack.c.l.b16 %v518
      %v792 = vunpack.c.h.b16 %v518
      %v793 = vunpack.c.l.b16 %v519
      %v794 = vunpack.c.h.b16 %v519
      %v795 = vunpack.c.l.b16 %v520
      %v796 = vunpack.c.l.b16 %v521
      %v797 = vunpack.c.h.b16 %v521
      %v798 = vunpack.c.l.b16 %v522
      %v799 = vunpack.c.h.b16 %v522
      %v800 = vunpack.c.l.b16 %v523
      %v801 = vunpack.c.h.b16 %v523
      %v802 = vunpack.c.l.b16 %v524
      %v803 = vunpack.c.l.b16 %v525
      %v804 = vunpack.c.h.b16 %v525
      %v805 = vunpack.c.l.b16 %v526
      %v806 = vunpack.c.h.b16 %v526
      %v807 = vunpack.c.l.b16 %v527
      %v808 = vunpack.c.h.b16 %v527
      %v809 = vunpack.c.l.b16 %v528
      %v810 = vunpack.c.l.b16 %v529
      %v811 = vunpack.c.h.b16 %v529
      %v812 = vunpack.c.l.b16 %v530
      %v813 = vunpack.c.h.b16 %v530
      %v814 = vunpack.c.l.b16 %v531
      %v815 = vunpack.c.h.b16 %v531
      %v816 = vunpack.c.l.b16 %v532
      %v817 = vpack.c.b16 %v712, %v705
      %v818 = vpack.c.b16 %v713, %v706
      %v819 = vpack.c.b16 %v714, %v707
      %v820 = vpack.c.b16 %v715, %v708
      %v821 = vpack.c.b16 %v716, %v709
      %v822 = vpack.c.b16 %v717, %v710
      %v823 = vpack.c.b16 %v718, %v711
      %v824 = vpack.c.b16 %v726, %v719
      %v825 = vpack.c.b16 %v727, %v720
      %v826 = vpack.c.b16 %v728, %v721
      %v827 = vpack.c.b16 %v729, %v722
      %v828 = vpack.c.b16 %v730, %v723
      %v829 = vpack.c.b16 %v731, %v724
      %v830 = vpack.c.b16 %v732, %v725
      %v831 = vpack.c.b16 %v740, %v733
      %v832 = vpack.c.b16 %v741, %v734
      %v833 = vpack.c.b16 %v742, %v735
      %v834 = vpack.c.b16 %v743, %v736
      %v835 = vpack.c.b16 %v744, %v737
      %v836 = vpack.c.b16 %v745, %v738
      %v837 = vpack.c.b16 %v746, %v739
      %v838 = vpack.c.b16 %v754, %v747
      %v839 = vpack.c.b16 %v755, %v748
      %v840 = vpack.c.b16 %v756, %v749
      %v841 = vpack.c.b16 %v757, %v750
      %v842 = vpack.c.b16 %v758, %v751
      %v843 = vpack.c.b16 %v759, %v752
      %v844 = vpack.c.b16 %v760, %v753
      %v845 = vpack.c.b16 %v768, %v761
      %v846 = vpack.c.b16 %v769, %v762
      %v847 = vpack.c.b16 %v770, %v763
      %v848 = vpack.c.b16 %v771, %v764
      %v849 = vpack.c.b16 %v772, %v765
      %v850 = vpack.c.b16 %v773, %v766
      %v851 = vpack.c.b16 %v774, %v767
      %v852 = vpack.c.b16 %v782, %v775
      %v853 = vpack.c.b16 %v783, %v776
      %v854 = vpack.c.b16 %v784, %v777
      %v855 = vpack.c.b16 %v785, %v778
      %v856 = vpack.c.b16 %v786, %v779
      %v857 = vpack.c.b16 %v787, %v780
      %v858 = vpack.c.b16 %v788, %v781
      %v859 = vpack.c.b16 %v796, %v789
      %v860 = vpack.c.b16 %v797, %v790
      %v861 = vpack.c.b16 %v798, %v791
      %v862 = vpack.c.b16 %v799, %v792
      %v863 = vpack.c.b16 %v800, %v793
      %v864 = vpack.c.b16 %v801, %v794
      %v865 = vpack.c.b16 %v802, %v795
      %v866 = vpack.c.b16 %v810, %v803
      %v867 = vpack.c.b16 %v811, %v804
      %v868 = vpack.c.b16 %v812, %v805
      %v869 = vpack.c.b16 %v813, %v806
      %v870 = vpack.c.b16 %v814, %v807
      %v871 = vpack.c.b16 %v815, %v808
      %v872 = vpack.c.b16 %v816, %v809
      %929 = vmatprep.subr.bf16.mxu0 %v818
      %930 = vmatpush1.bf16.msra.mxu0 %v817
      %931 = vmatprep.subr.bf16.mxu0 %v825
      %932 = vmatpush1.bf16.msra.mxu0 %v824
      %933 = vmatprep.subr.bf16.mxu0 %v832
      %934 = vmatpush1.bf16.msra.mxu0 %v831
      %935 = vmatprep.subr.bf16.mxu0 %v839
      %936 = vmatpush1.bf16.msra.mxu0 %v838
      %937 = vmatprep.subr.bf16.mxu0 %v846
      %938 = vmatpush1.bf16.msra.mxu0 %v845
      %939 = vmatprep.subr.bf16.mxu0 %v853
      %940 = vmatpush1.bf16.msra.mxu0 %v852
      %941 = vmatprep.subr.bf16.mxu0 %v860
      %942 = vmatpush1.bf16.msra.mxu0 %v859
      %943 = vmatprep.subr.bf16.mxu0 %v867
      %944 = vmatpush1.bf16.msra.mxu0 %v866
      %945 = vmatprep.subr.bf16.mxu0 0
      %946 = vmatpush1.bf16.msra.mxu0 0
      %947 = vmatprep.subr.bf16.mxu0 0
      %948 = vmatpush1.bf16.msra.mxu0 0
      %949 = vmatprep.subr.bf16.mxu0 0
      %950 = vmatpush1.bf16.msra.mxu0 0
      %951 = vmatprep.subr.bf16.mxu0 0
      %952 = vmatpush1.bf16.msra.mxu0 0
      %953 = vmatprep.subr.bf16.mxu0 0
      %954 = vmatpush1.bf16.msra.mxu0 0
      %955 = vmatprep.subr.bf16.mxu0 0
      %956 = vmatpush1.bf16.msra.mxu0 0
      %957 = vmatprep.subr.bf16.mxu0 0
      %958 = vmatpush1.bf16.msra.mxu0 0
      %959 = vmatprep.subr.bf16.mxu0 0
      %960 = vmatpush1.bf16.msra.mxu0 0
      %961 = vmatprep.mubr.bf16.mxu0 0
      %962 = vmatmul.mubr.bf16.gmra.mrb[0].mxu0 %v605
      %v963 = vpop.f32.mrb[0].mxu0
      %v964 = vadd.f32 0.0, %v963
      %v965 = vpop.f32.mrb[0].mxu0
      %v966 = vpop.f32.mrb[0].mxu0
      %v967 = vadd.f32 0.0, %v966
      %v968 = vpop.f32.mrb[0].mxu0
      %969 = vmatprep.mubr.bf16.mxu0 0
      %970 = vmatmul.mubr.bf16.gmra.mrb[0].mxu0 %v606
      %v971 = vpop.f32.mrb[0].mxu0
      %v972 = vadd.f32 0.0, %v971
      %v973 = vpop.f32.mrb[0].mxu0
      %v974 = vadd.f32 0.0, %v973
      %v975 = vpop.f32.mrb[0].mxu0
      %v976 = vadd.f32 0.0, %v975
      %v977 = vpop.f32.mrb[0].mxu0
      %v978 = vadd.f32 0.0, %v977
      %979 = vmatprep.mubr.bf16.mxu0 0
      %980 = vmatmul.mubr.bf16.gmra.mrb[0].mxu0 %v607
      %v981 = vpop.f32.mrb[0].mxu0
      %v982 = vadd.f32 0.0, %v981
      %v983 = vpop.f32.mrb[0].mxu0
      %v984 = vadd.f32 0.0, %v983
      %v985 = vpop.f32.mrb[0].mxu0
      %v986 = vadd.f32 0.0, %v985
      %v987 = vpop.f32.mrb[0].mxu0
      %v988 = vadd.f32 0.0, %v987
      %989 = vmatprep.mubr.bf16.mxu0 0
      %990 = vmatmul.mubr.bf16.gmra.mrb[0].mxu0 %v608
      %v991 = vpop.f32.mrb[0].mxu0
      %v992 = vadd.f32 0.0, %v991
      %v993 = vpop.f32.mrb[0].mxu0
      %v994 = vadd.f32 0.0, %v993
      %v995 = vpop.f32.mrb[0].mxu0
      %v996 = vadd.f32 0.0, %v995
      %v997 = vpop.f32.mrb[0].mxu0
      %v998 = vadd.f32 0.0, %v997
      %999 = vmatprep.mubr.bf16.mxu0 0
      %1000 = vmatmul.mubr.bf16.gmra.mrb[0].mxu0 %v609
      %v1001 = vpop.f32.mrb[0].mxu0
      %v1002 = vadd.f32 0.0, %v1001
      %v1003 = vpop.f32.mrb[0].mxu0
      %v1004 = vadd.f32 0.0, %v1003
      %v1005 = vpop.f32.mrb[0].mxu0
      %v1006 = vadd.f32 0.0, %v1005
      %v1007 = vpop.f32.mrb[0].mxu0
      %v1008 = vadd.f32 0.0, %v1007
      %1009 = vmatprep.mubr.bf16.mxu0 0
      %1010 = vmatmul.mubr.bf16.gmra.mrb[0].mxu0 %v610
      %v1011 = vpop.f32.mrb[0].mxu0
      %v1012 = vadd.f32 0.0, %v1011
      %v1013 = vpop.f32.mrb[0].mxu0
      %v1014 = vadd.f32 0.0, %v1013
      %v1015 = vpop.f32.mrb[0].mxu0
      %v1016 = vadd.f32 0.0, %v1015
      %v1017 = vpop.f32.mrb[0].mxu0
      %v1018 = vadd.f32 0.0, %v1017
      %1019 = vmatprep.mubr.bf16.mxu0 0
      %1020 = vmatmul.mubr.bf16.gmra.mrb[0].mxu0 %v611
      %v1021 = vpop.f32.mrb[0].mxu0
      %v1022 = vadd.f32 0.0, %v1021
      %v1023 = vpop.f32.mrb[0].mxu0
      %v1024 = vadd.f32 0.0, %v1023
      %v1025 = vpop.f32.mrb[0].mxu0
      %v1026 = vadd.f32 0.0, %v1025
      %v1027 = vpop.f32.mrb[0].mxu0
      %v1028 = vadd.f32 0.0, %v1027
      %1029 = vmatprep.mubr.bf16.mxu0 0
      %1030 = vmatmul.mubr.bf16.gmra.mrb[0].mxu0 %v612
      %v1031 = vpop.f32.mrb[0].mxu0
      %v1032 = vadd.f32 0.0, %v1031
      %v1033 = vpop.f32.mrb[0].mxu0
      %v1034 = vadd.f32 0.0, %v1033
      %v1035 = vpop.f32.mrb[0].mxu0
      %v1036 = vadd.f32 0.0, %v1035
      %v1037 = vpop.f32.mrb[0].mxu0
      %v1038 = vadd.f32 0.0, %v1037
      %1039 = vmatprep.mubr.bf16.mxu0 0
      %1040 = vmatmul.mubr.bf16.gmra.mrb[0].mxu0 %v613
      %v1041 = vpop.f32.mrb[0].mxu0
      %v1042 = vadd.f32 0.0, %v1041
      %v1043 = vpop.f32.mrb[0].mxu0
      %v1044 = vadd.f32 0.0, %v1043
      %v1045 = vpop.f32.mrb[0].mxu0
      %v1046 = vadd.f32 0.0, %v1045
      %v1047 = vpop.f32.mrb[0].mxu0
      %v1048 = vadd.f32 0.0, %v1047
      %1049 = vmatprep.mubr.bf16.mxu0 0
      %1050 = vmatmul.mubr.bf16.gmra.mrb[0].mxu0 %v614
      %v1051 = vpop.f32.mrb[0].mxu0
      %v1052 = vadd.f32 0.0, %v1051
      %v1053 = vpop.f32.mrb[0].mxu0
      %v1054 = vadd.f32 0.0, %v1053
      %v1055 = vpop.f32.mrb[0].mxu0
      %v1056 = vadd.f32 0.0, %v1055
      %v1057 = vpop.f32.mrb[0].mxu0
      %v1058 = vadd.f32 0.0, %v1057
      %1059 = vmatprep.mubr.bf16.mxu0 0
      %1060 = vmatmul.mubr.bf16.gmra.mrb[0].mxu0 %v615
      %v1061 = vpop.f32.mrb[0].mxu0
      %v1062 = vadd.f32 0.0, %v1061
      %v1063 = vpop.f32.mrb[0].mxu0
      %v1064 = vadd.f32 0.0, %v1063
      %v1065 = vpop.f32.mrb[0].mxu0
      %v1066 = vadd.f32 0.0, %v1065
      %v1067 = vpop.f32.mrb[0].mxu0
      %v1068 = vadd.f32 0.0, %v1067
      %1069 = vmatprep.mubr.bf16.mxu0 0
      %1070 = vmatmul.mubr.bf16.gmra.mrb[0].mxu0 %v616
      %v1071 = vpop.f32.mrb[0].mxu0
      %v1072 = vadd.f32 0.0, %v1071
      %v1073 = vpop.f32.mrb[0].mxu0
      %v1074 = vadd.f32 0.0, %v1073
      %v1075 = vpop.f32.mrb[0].mxu0
      %v1076 = vadd.f32 0.0, %v1075
      %v1077 = vpop.f32.mrb[0].mxu0
      %v1078 = vadd.f32 0.0, %v1077
      %1079 = vmatprep.mubr.bf16.mxu0 0
      %1080 = vmatmul.mubr.bf16.gmra.mrb[0].mxu0 %v617
      %v1081 = vpop.f32.mrb[0].mxu0
      %v1082 = vadd.f32 0.0, %v1081
      %v1083 = vpop.f32.mrb[0].mxu0
      %v1084 = vadd.f32 0.0, %v1083
      %v1085 = vpop.f32.mrb[0].mxu0
      %v1086 = vadd.f32 0.0, %v1085
      %v1087 = vpop.f32.mrb[0].mxu0
      %v1088 = vadd.f32 0.0, %v1087
      %1089 = vmatprep.mubr.bf16.mxu0 0
      %1090 = vmatmul.mubr.bf16.gmra.mrb[0].mxu0 %v618
      %v1091 = vpop.f32.mrb[0].mxu0
      %v1092 = vadd.f32 0.0, %v1091
      %v1093 = vpop.f32.mrb[0].mxu0
      %v1094 = vadd.f32 0.0, %v1093
      %v1095 = vpop.f32.mrb[0].mxu0
      %v1096 = vadd.f32 0.0, %v1095
      %v1097 = vpop.f32.mrb[0].mxu0
      %v1098 = vadd.f32 0.0, %v1097
      %1099 = vmatprep.mubr.bf16.mxu0 0
      %1100 = vmatmul.mubr.bf16.gmra.mrb[0].mxu0 %v619
      %v1101 = vpop.f32.mrb[0].mxu0
      %v1102 = vadd.f32 0.0, %v1101
      %v1103 = vpop.f32.mrb[0].mxu0
      %v1104 = vadd.f32 0.0, %v1103
      %v1105 = vpop.f32.mrb[0].mxu0
      %v1106 = vadd.f32 0.0, %v1105
      %v1107 = vpop.f32.mrb[0].mxu0
      %v1108 = vadd.f32 0.0, %v1107
      %1109 = vmatprep.mubr.bf16.mxu0 0
      %1110 = vmatmul.mubr.bf16.gmra.mrb[0].mxu0 %v620
      %v1111 = vpop.f32.mrb[0].mxu0
      %v1112 = vadd.f32 0.0, %v1111
      %v1113 = vpop.f32.mrb[0].mxu0
      %v1114 = vadd.f32 0.0, %v1113
      %v1115 = vpop.f32.mrb[0].mxu0
      %v1116 = vadd.f32 0.0, %v1115
      %v1117 = vpop.f32.mrb[0].mxu0
      %v1118 = vadd.f32 0.0, %v1117
      %1119 = vmatprep.mubr.bf16.mxu0 0
      %1120 = vmatmul.mubr.bf16.gmra.mrb[0].mxu0 %v621
      %v1121 = vpop.f32.mrb[0].mxu0
      %v1122 = vpop.f32.mrb[0].mxu0
      %v1123 = vadd.f32 0.0, %v1122
      %v1124 = vpop.f32.mrb[0].mxu0
      %v1125 = vpop.f32.mrb[0].mxu0
      %v1126 = vadd.f32 0.0, %v1125
      %1127 = vmatprep.mubr.bf16.mxu0 0
      %1128 = vmatmul.mubr.bf16.gmra.mrb[0].mxu0 %v622
      %v1129 = vpop.f32.mrb[0].mxu0
      %v1130 = vpop.f32.mrb[0].mxu0
      %v1131 = vpop.f32.mrb[0].mxu0
      %v1132 = vpop.f32.mrb[0].mxu0
      %1133 = vdwg.mxu0
      %1134 = vmatprep.subr.bf16.mxu0 %v820
      %1135 = vmatpush1.bf16.msra.mxu0 %v819
      %1136 = vmatprep.subr.bf16.mxu0 %v827
      %1137 = vmatpush1.bf16.msra.mxu0 %v826
      %1138 = vmatprep.subr.bf16.mxu0 %v834
      %1139 = vmatpush1.bf16.msra.mxu0 %v833
      %1140 = vmatprep.subr.bf16.mxu0 %v841
      %1141 = vmatpush1.bf16.msra.mxu0 %v840
      %1142 = vmatprep.subr.bf16.mxu0 %v848
      %1143 = vmatpush1.bf16.msra.mxu0 %v847
      %1144 = vmatprep.subr.bf16.mxu0 %v855
      %1145 = vmatpush1.bf16.msra.mxu0 %v854
      %1146 = vmatprep.subr.bf16.mxu0 %v862
      %1147 = vmatpush1.bf16.msra.mxu0 %v861
      %1148 = vmatprep.subr.bf16.mxu0 %v869
      %1149 = vmatpush1.bf16.msra.mxu0 %v868
      %1150 = vmatprep.subr.bf16.mxu0 0
      %1151 = vmatpush1.bf16.msra.mxu0 0
      %1152 = vmatprep.subr.bf16.mxu0 0
      %1153 = vmatpush1.bf16.msra.mxu0 0
      %1154 = vmatprep.subr.bf16.mxu0 0
      %1155 = vmatpush1.bf16.msra.mxu0 0
      %1156 = vmatprep.subr.bf16.mxu0 0
      %1157 = vmatpush1.bf16.msra.mxu0 0
      %1158 = vmatprep.subr.bf16.mxu0 0
      %1159 = vmatpush1.bf16.msra.mxu0 0
      %1160 = vmatprep.subr.bf16.mxu0 0
      %1161 = vmatpush1.bf16.msra.mxu0 0
      %1162 = vmatprep.subr.bf16.mxu0 0
      %1163 = vmatpush1.bf16.msra.mxu0 0
      %1164 = vmatprep.subr.bf16.mxu0 0
      %1165 = vmatpush1.bf16.msra.mxu0 0
      %1166 = vmatprep.mubr.bf16.mxu0 0
      %1167 = vmatmul.mubr.bf16.gmra.mrb[0].mxu0 %v605
      %v1168 = vpop.f32.mrb[0].mxu0
      %v1169 = vpop.f32.mrb[0].mxu0
      %v1170 = vpop.f32.mrb[0].mxu0
      %v1171 = vpop.f32.mrb[0].mxu0
      %1172 = vmatprep.mubr.bf16.mxu0 0
      %1173 = vmatmul.mubr.bf16.gmra.mrb[0].mxu0 %v606
      %v1174 = vpop.f32.mrb[0].mxu0
      %v1175 = vpop.f32.mrb[0].mxu0
      %v1176 = vadd.f32 0.0, %v1175
      %v1177 = vpop.f32.mrb[0].mxu0
      %v1178 = vpop.f32.mrb[0].mxu0
      %v1179 = vadd.f32 0.0, %v1178
      %1180 = vmatprep.mubr.bf16.mxu0 0
      %1181 = vmatmul.mubr.bf16.gmra.mrb[0].mxu0 %v607
      %v1182 = vpop.f32.mrb[0].mxu0
      %v1183 = vadd.f32 0.0, %v1182
      %v1184 = vpop.f32.mrb[0].mxu0
      %v1185 = vadd.f32 0.0, %v1184
      %v1186 = vpop.f32.mrb[0].mxu0
      %v1187 = vadd.f32 0.0, %v1186
      %v1188 = vpop.f32.mrb[0].mxu0
      %v1189 = vadd.f32 0.0, %v1188
      %1190 = vmatprep.mubr.bf16.mxu0 0
      %1191 = vmatmul.mubr.bf16.gmra.mrb[0].mxu0 %v608
      %v1192 = vpop.f32.mrb[0].mxu0
      %v1193 = vadd.f32 0.0, %v1192
      %v1194 = vpop.f32.mrb[0].mxu0
      %v1195 = vadd.f32 0.0, %v1194
      %v1196 = vpop.f32.mrb[0].mxu0
      %v1197 = vadd.f32 0.0, %v1196
      %v1198 = vpop.f32.mrb[0].mxu0
      %v1199 = vadd.f32 0.0, %v1198
      %1200 = vmatprep.mubr.bf16.mxu0 0
      %1201 = vmatmul.mubr.bf16.gmra.mrb[0].mxu0 %v609
      %v1202 = vpop.f32.mrb[0].mxu0
      %v1203 = vadd.f32 0.0, %v1202
      %v1204 = vpop.f32.mrb[0].mxu0
      %v1205 = vadd.f32 0.0, %v1204
      %v1206 = vpop.f32.mrb[0].mxu0
      %v1207 = vadd.f32 0.0, %v1206
      %v1208 = vpop.f32.mrb[0].mxu0
      %v1209 = vadd.f32 0.0, %v1208
      %1210 = vmatprep.mubr.bf16.mxu0 0
      %1211 = vmatmul.mubr.bf16.gmra.mrb[0].mxu0 %v610
      %v1212 = vpop.f32.mrb[0].mxu0
      %v1213 = vadd.f32 0.0, %v1212
      %v1214 = vpop.f32.mrb[0].mxu0
      %v1215 = vadd.f32 0.0, %v1214
      %v1216 = vpop.f32.mrb[0].mxu0
      %v1217 = vadd.f32 0.0, %v1216
      %v1218 = vpop.f32.mrb[0].mxu0
      %v1219 = vadd.f32 0.0, %v1218
      %1220 = vmatprep.mubr.bf16.mxu0 0
      %1221 = vmatmul.mubr.bf16.gmra.mrb[0].mxu0 %v611
      %v1222 = vpop.f32.mrb[0].mxu0
      %v1223 = vadd.f32 0.0, %v1222
      %v1224 = vpop.f32.mrb[0].mxu0
      %v1225 = vadd.f32 0.0, %v1224
      %v1226 = vpop.f32.mrb[0].mxu0
      %v1227 = vadd.f32 0.0, %v1226
      %v1228 = vpop.f32.mrb[0].mxu0
      %v1229 = vadd.f32 0.0, %v1228
      %1230 = vmatprep.mubr.bf16.mxu0 0
      %1231 = vmatmul.mubr.bf16.gmra.mrb[0].mxu0 %v612
      %v1232 = vpop.f32.mrb[0].mxu0
      %v1233 = vadd.f32 0.0, %v1232
      %v1234 = vpop.f32.mrb[0].mxu0
      %v1235 = vadd.f32 0.0, %v1234
      %v1236 = vpop.f32.mrb[0].mxu0
      %v1237 = vadd.f32 0.0, %v1236
      %v1238 = vpop.f32.mrb[0].mxu0
      %v1239 = vadd.f32 0.0, %v1238
      %1240 = vmatprep.mubr.bf16.mxu0 0
      %1241 = vmatmul.mubr.bf16.gmra.mrb[0].mxu0 %v613
      %v1242 = vpop.f32.mrb[0].mxu0
      %v1243 = vadd.f32 0.0, %v1242
      %v1244 = vpop.f32.mrb[0].mxu0
      %v1245 = vadd.f32 0.0, %v1244
      %v1246 = vpop.f32.mrb[0].mxu0
      %v1247 = vadd.f32 0.0, %v1246
      %v1248 = vpop.f32.mrb[0].mxu0
      %v1249 = vadd.f32 0.0, %v1248
      %1250 = vmatprep.mubr.bf16.mxu0 0
      %1251 = vmatmul.mubr.bf16.gmra.mrb[0].mxu0 %v614
      %v1252 = vpop.f32.mrb[0].mxu0
      %v1253 = vadd.f32 0.0, %v1252
      %v1254 = vpop.f32.mrb[0].mxu0
      %v1255 = vadd.f32 0.0, %v1254
      %v1256 = vpop.f32.mrb[0].mxu0
      %v1257 = vadd.f32 0.0, %v1256
      %v1258 = vpop.f32.mrb[0].mxu0
      %v1259 = vadd.f32 0.0, %v1258
      %1260 = vmatprep.mubr.bf16.mxu0 0
      %1261 = vmatmul.mubr.bf16.gmra.mrb[0].mxu0 %v615
      %v1262 = vpop.f32.mrb[0].mxu0
      %v1263 = vadd.f32 0.0, %v1262
      %v1264 = vpop.f32.mrb[0].mxu0
      %v1265 = vadd.f32 0.0, %v1264
      %v1266 = vpop.f32.mrb[0].mxu0
      %v1267 = vadd.f32 0.0, %v1266
      %v1268 = vpop.f32.mrb[0].mxu0
      %v1269 = vadd.f32 0.0, %v1268
      %1270 = vmatprep.mubr.bf16.mxu0 0
      %1271 = vmatmul.mubr.bf16.gmra.mrb[0].mxu0 %v616
      %v1272 = vpop.f32.mrb[0].mxu0
      %v1273 = vadd.f32 0.0, %v1272
      %v1274 = vpop.f32.mrb[0].mxu0
      %v1275 = vadd.f32 0.0, %v1274
      %v1276 = vpop.f32.mrb[0].mxu0
      %v1277 = vadd.f32 0.0, %v1276
      %v1278 = vpop.f32.mrb[0].mxu0
      %v1279 = vadd.f32 0.0, %v1278
      %1280 = vmatprep.mubr.bf16.mxu0 0
      %1281 = vmatmul.mubr.bf16.gmra.mrb[0].mxu0 %v617
      %v1282 = vpop.f32.mrb[0].mxu0
      %v1283 = vadd.f32 0.0, %v1282
      %v1284 = vpop.f32.mrb[0].mxu0
      %v1285 = vadd.f32 0.0, %v1284
      %v1286 = vpop.f32.mrb[0].mxu0
      %v1287 = vadd.f32 0.0, %v1286
      %v1288 = vpop.f32.mrb[0].mxu0
      %v1289 = vadd.f32 0.0, %v1288
      %1290 = vmatprep.mubr.bf16.mxu0 0
      %1291 = vmatmul.mubr.bf16.gmra.mrb[0].mxu0 %v618
      %v1292 = vpop.f32.mrb[0].mxu0
      %v1293 = vadd.f32 0.0, %v1292
      %v1294 = vpop.f32.mrb[0].mxu0
      %v1295 = vadd.f32 0.0, %v1294
      %v1296 = vpop.f32.mrb[0].mxu0
      %v1297 = vadd.f32 0.0, %v1296
      %v1298 = vpop.f32.mrb[0].mxu0
      %v1299 = vadd.f32 0.0, %v1298
      %1300 = vmatprep.mubr.bf16.mxu0 0
      %1301 = vmatmul.mubr.bf16.gmra.mrb[0].mxu0 %v619
      %v1302 = vpop.f32.mrb[0].mxu0
      %v1303 = vadd.f32 0.0, %v1302
      %v1304 = vpop.f32.mrb[0].mxu0
      %v1305 = vadd.f32 0.0, %v1304
      %v1306 = vpop.f32.mrb[0].mxu0
      %v1307 = vadd.f32 0.0, %v1306
      %v1308 = vpop.f32.mrb[0].mxu0
      %v1309 = vadd.f32 0.0, %v1308
      %1310 = vmatprep.mubr.bf16.mxu0 0
      %1311 = vmatmul.mubr.bf16.gmra.mrb[0].mxu0 %v620
      %v1312 = vpop.f32.mrb[0].mxu0
      %v1313 = vadd.f32 0.0, %v1312
      %v1314 = vpop.f32.mrb[0].mxu0
      %v1315 = vadd.f32 0.0, %v1314
      %v1316 = vpop.f32.mrb[0].mxu0
      %v1317 = vadd.f32 0.0, %v1316
      %v1318 = vpop.f32.mrb[0].mxu0
      %v1319 = vadd.f32 0.0, %v1318
      %1320 = vmatprep.mubr.bf16.mxu0 0
      %1321 = vmatmul.mubr.bf16.gmra.mrb[0].mxu0 %v621
      %v1322 = vpop.f32.mrb[0].mxu0
      %v1323 = vadd.f32 0.0, %v1322
      %v1324 = vpop.f32.mrb[0].mxu0
      %v1325 = vadd.f32 0.0, %v1324
      %v1326 = vpop.f32.mrb[0].mxu0
      %v1327 = vadd.f32 0.0, %v1326
      %v1328 = vpop.f32.mrb[0].mxu0
      %v1329 = vadd.f32 0.0, %v1328
      %1330 = vmatprep.mubr.bf16.mxu0 0
      %1331 = vmatmul.mubr.bf16.gmra.mrb[0].mxu0 %v622
      %v1332 = vpop.f32.mrb[0].mxu0
      %v1333 = vadd.f32 0.0, %v1332
      %v1334 = vpop.f32.mrb[0].mxu0
      %v1335 = vpop.f32.mrb[0].mxu0
      %v1336 = vadd.f32 0.0, %v1335
      %v1337 = vpop.f32.mrb[0].mxu0
      %1338 = vdwg.mxu0
      %1339 = vmatprep.subr.bf16.mxu0 %v822
      %1340 = vmatpush1.bf16.msra.mxu0 %v821
      %1341 = vmatprep.subr.bf16.mxu0 %v829
      %1342 = vmatpush1.bf16.msra.mxu0 %v828
      %1343 = vmatprep.subr.bf16.mxu0 %v836
      %1344 = vmatpush1.bf16.msra.mxu0 %v835
      %1345 = vmatprep.subr.bf16.mxu0 %v843
      %1346 = vmatpush1.bf16.msra.mxu0 %v842
      %1347 = vmatprep.subr.bf16.mxu0 %v850
      %1348 = vmatpush1.bf16.msra.mxu0 %v849
      %1349 = vmatprep.subr.bf16.mxu0 %v857
      %1350 = vmatpush1.bf16.msra.mxu0 %v856
      %1351 = vmatprep.subr.bf16.mxu0 %v864
      %1352 = vmatpush1.bf16.msra.mxu0 %v863
      %1353 = vmatprep.subr.bf16.mxu0 %v871
      %1354 = vmatpush1.bf16.msra.mxu0 %v870
      %1355 = vmatprep.subr.bf16.mxu0 0
      %1356 = vmatpush1.bf16.msra.mxu0 0
      %1357 = vmatprep.subr.bf16.mxu0 0
      %1358 = vmatpush1.bf16.msra.mxu0 0
      %1359 = vmatprep.subr.bf16.mxu0 0
      %1360 = vmatpush1.bf16.msra.mxu0 0
      %1361 = vmatprep.subr.bf16.mxu0 0
      %1362 = vmatpush1.bf16.msra.mxu0 0
      %1363 = vmatprep.subr.bf16.mxu0 0
      %1364 = vmatpush1.bf16.msra.mxu0 0
      %1365 = vmatprep.subr.bf16.mxu0 0
      %1366 = vmatpush1.bf16.msra.mxu0 0
      %1367 = vmatprep.subr.bf16.mxu0 0
      %1368 = vmatpush1.bf16.msra.mxu0 0
      %1369 = vmatprep.subr.bf16.mxu0 0
      %1370 = vmatpush1.bf16.msra.mxu0 0
      %1371 = vmatprep.mubr.bf16.mxu0 0
      %1372 = vmatmul.mubr.bf16.gmra.mrb[0].mxu0 %v605
      %v1373 = vpop.f32.mrb[0].mxu0
      %v1374 = vpop.f32.mrb[0].mxu0
      %v1375 = vpop.f32.mrb[0].mxu0
      %v1376 = vpop.f32.mrb[0].mxu0
      %1377 = vmatprep.mubr.bf16.mxu0 0
      %1378 = vmatmul.mubr.bf16.gmra.mrb[0].mxu0 %v606
      %v1379 = vpop.f32.mrb[0].mxu0
      %v1380 = vadd.f32 0.0, %v1379
      %v1381 = vpop.f32.mrb[0].mxu0
      %v1382 = vadd.f32 0.0, %v1381
      %v1383 = vpop.f32.mrb[0].mxu0
      %v1384 = vadd.f32 0.0, %v1383
      %v1385 = vpop.f32.mrb[0].mxu0
      %v1386 = vadd.f32 0.0, %v1385
      %1387 = vmatprep.mubr.bf16.mxu0 0
      %1388 = vmatmul.mubr.bf16.gmra.mrb[0].mxu0 %v607
      %v1389 = vpop.f32.mrb[0].mxu0
      %v1390 = vadd.f32 0.0, %v1389
      %v1391 = vpop.f32.mrb[0].mxu0
      %v1392 = vadd.f32 0.0, %v1391
      %v1393 = vpop.f32.mrb[0].mxu0
      %v1394 = vadd.f32 0.0, %v1393
      %v1395 = vpop.f32.mrb[0].mxu0
      %v1396 = vadd.f32 0.0, %v1395
      %1397 = vmatprep.mubr.bf16.mxu0 0
      %1398 = vmatmul.mubr.bf16.gmra.mrb[0].mxu0 %v608
      %v1399 = vpop.f32.mrb[0].mxu0
      %v1400 = vadd.f32 0.0, %v1399
      %v1401 = vpop.f32.mrb[0].mxu0
      %v1402 = vadd.f32 0.0, %v1401
      %v1403 = vpop.f32.mrb[0].mxu0
      %v1404 = vadd.f32 0.0, %v1403
      %v1405 = vpop.f32.mrb[0].mxu0
      %v1406 = vadd.f32 0.0, %v1405
      %1407 = vmatprep.mubr.bf16.mxu0 0
      %1408 = vmatmul.mubr.bf16.gmra.mrb[0].mxu0 %v609
      %v1409 = vpop.f32.mrb[0].mxu0
      %v1410 = vadd.f32 0.0, %v1409
      %v1411 = vpop.f32.mrb[0].mxu0
      %v1412 = vadd.f32 0.0, %v1411
      %v1413 = vpop.f32.mrb[0].mxu0
      %v1414 = vadd.f32 0.0, %v1413
      %v1415 = vpop.f32.mrb[0].mxu0
      %v1416 = vadd.f32 0.0, %v1415
      %1417 = vmatprep.mubr.bf16.mxu0 0
      %1418 = vmatmul.mubr.bf16.gmra.mrb[0].mxu0 %v610
      %v1419 = vpop.f32.mrb[0].mxu0
      %v1420 = vadd.f32 0.0, %v1419
      %v1421 = vpop.f32.mrb[0].mxu0
      %v1422 = vadd.f32 0.0, %v1421
      %v1423 = vpop.f32.mrb[0].mxu0
      %v1424 = vadd.f32 0.0, %v1423
      %v1425 = vpop.f32.mrb[0].mxu0
      %v1426 = vadd.f32 0.0, %v1425
      %1427 = vmatprep.mubr.bf16.mxu0 0
      %1428 = vmatmul.mubr.bf16.gmra.mrb[0].mxu0 %v611
      %v1429 = vpop.f32.mrb[0].mxu0
      %v1430 = vadd.f32 0.0, %v1429
      %v1431 = vpop.f32.mrb[0].mxu0
      %v1432 = vadd.f32 0.0, %v1431
      %v1433 = vpop.f32.mrb[0].mxu0
      %v1434 = vadd.f32 0.0, %v1433
      %v1435 = vpop.f32.mrb[0].mxu0
      %v1436 = vadd.f32 0.0, %v1435
      %1437 = vmatprep.mubr.bf16.mxu0 0
      %1438 = vmatmul.mubr.bf16.gmra.mrb[0].mxu0 %v612
      %v1439 = vpop.f32.mrb[0].mxu0
      %v1440 = vadd.f32 0.0, %v1439
      %v1441 = vpop.f32.mrb[0].mxu0
      %v1442 = vadd.f32 0.0, %v1441
      %v1443 = vpop.f32.mrb[0].mxu0
      %v1444 = vadd.f32 0.0, %v1443
      %v1445 = vpop.f32.mrb[0].mxu0
      %v1446 = vadd.f32 0.0, %v1445
      %1447 = vmatprep.mubr.bf16.mxu0 0
      %1448 = vmatmul.mubr.bf16.gmra.mrb[0].mxu0 %v613
      %v1449 = vpop.f32.mrb[0].mxu0
      %v1450 = vadd.f32 0.0, %v1449
      %v1451 = vpop.f32.mrb[0].mxu0
      %v1452 = vadd.f32 0.0, %v1451
      %v1453 = vpop.f32.mrb[0].mxu0
      %v1454 = vadd.f32 0.0, %v1453
      %v1455 = vpop.f32.mrb[0].mxu0
      %v1456 = vadd.f32 0.0, %v1455
      %1457 = vmatprep.mubr.bf16.mxu0 0
      %1458 = vmatmul.mubr.bf16.gmra.mrb[0].mxu0 %v614
      %v1459 = vpop.f32.mrb[0].mxu0
      %v1460 = vadd.f32 0.0, %v1459
      %v1461 = vpop.f32.mrb[0].mxu0
      %v1462 = vadd.f32 0.0, %v1461
      %v1463 = vpop.f32.mrb[0].mxu0
      %v1464 = vadd.f32 0.0, %v1463
      %v1465 = vpop.f32.mrb[0].mxu0
      %v1466 = vadd.f32 0.0, %v1465
      %1467 = vmatprep.mubr.bf16.mxu0 0
      %1468 = vmatmul.mubr.bf16.gmra.mrb[0].mxu0 %v615
      %v1469 = vpop.f32.mrb[0].mxu0
      %v1470 = vadd.f32 0.0, %v1469
      %v1471 = vpop.f32.mrb[0].mxu0
      %v1472 = vadd.f32 0.0, %v1471
      %v1473 = vpop.f32.mrb[0].mxu0
      %v1474 = vadd.f32 0.0, %v1473
      %v1475 = vpop.f32.mrb[0].mxu0
      %v1476 = vadd.f32 0.0, %v1475
      %1477 = vmatprep.mubr.bf16.mxu0 0
      %1478 = vmatmul.mubr.bf16.gmra.mrb[0].mxu0 %v616
      %v1479 = vpop.f32.mrb[0].mxu0
      %v1480 = vadd.f32 0.0, %v1479
      %v1481 = vpop.f32.mrb[0].mxu0
      %v1482 = vadd.f32 0.0, %v1481
      %v1483 = vpop.f32.mrb[0].mxu0
      %v1484 = vadd.f32 0.0, %v1483
      %v1485 = vpop.f32.mrb[0].mxu0
      %v1486 = vadd.f32 0.0, %v1485
      %1487 = vmatprep.mubr.bf16.mxu0 0
      %1488 = vmatmul.mubr.bf16.gmra.mrb[0].mxu0 %v617
      %v1489 = vpop.f32.mrb[0].mxu0
      %v1490 = vadd.f32 0.0, %v1489
      %v1491 = vpop.f32.mrb[0].mxu0
      %v1492 = vadd.f32 0.0, %v1491
      %v1493 = vpop.f32.mrb[0].mxu0
      %v1494 = vadd.f32 0.0, %v1493
      %v1495 = vpop.f32.mrb[0].mxu0
      %v1496 = vadd.f32 0.0, %v1495
      %1497 = vmatprep.mubr.bf16.mxu0 0
      %1498 = vmatmul.mubr.bf16.gmra.mrb[0].mxu0 %v618
      %v1499 = vpop.f32.mrb[0].mxu0
      %v1500 = vadd.f32 0.0, %v1499
      %v1501 = vpop.f32.mrb[0].mxu0
      %v1502 = vadd.f32 0.0, %v1501
      %v1503 = vpop.f32.mrb[0].mxu0
      %v1504 = vadd.f32 0.0, %v1503
      %v1505 = vpop.f32.mrb[0].mxu0
      %v1506 = vadd.f32 0.0, %v1505
      %1507 = vmatprep.mubr.bf16.mxu0 0
      %1508 = vmatmul.mubr.bf16.gmra.mrb[0].mxu0 %v619
      %v1509 = vpop.f32.mrb[0].mxu0
      %v1510 = vadd.f32 0.0, %v1509
      %v1511 = vpop.f32.mrb[0].mxu0
      %v1512 = vadd.f32 0.0, %v1511
      %v1513 = vpop.f32.mrb[0].mxu0
      %v1514 = vadd.f32 0.0, %v1513
      %v1515 = vpop.f32.mrb[0].mxu0
      %v1516 = vadd.f32 0.0, %v1515
      %1517 = vmatprep.mubr.bf16.mxu0 0
      %1518 = vmatmul.mubr.bf16.gmra.mrb[0].mxu0 %v620
      %v1519 = vpop.f32.mrb[0].mxu0
      %v1520 = vadd.f32 0.0, %v1519
      %v1521 = vpop.f32.mrb[0].mxu0
      %v1522 = vadd.f32 0.0, %v1521
      %v1523 = vpop.f32.mrb[0].mxu0
      %v1524 = vadd.f32 0.0, %v1523
      %v1525 = vpop.f32.mrb[0].mxu0
      %v1526 = vadd.f32 0.0, %v1525
      %1527 = vmatprep.mubr.bf16.mxu0 0
      %1528 = vmatmul.mubr.bf16.gmra.mrb[0].mxu0 %v621
      %v1529 = vpop.f32.mrb[0].mxu0
      %v1530 = vadd.f32 0.0, %v1529
      %v1531 = vpop.f32.mrb[0].mxu0
      %v1532 = vadd.f32 0.0, %v1531
      %v1533 = vpop.f32.mrb[0].mxu0
      %v1534 = vadd.f32 0.0, %v1533
      %v1535 = vpop.f32.mrb[0].mxu0
      %v1536 = vadd.f32 0.0, %v1535
      %1537 = vmatprep.mubr.bf16.mxu0 0
      %1538 = vmatmul.mubr.bf16.gmra.mrb[0].mxu0 %v622
      %v1539 = vpop.f32.mrb[0].mxu0
      %v1540 = vpop.f32.mrb[0].mxu0
      %v1541 = vpop.f32.mrb[0].mxu0
      %v1542 = vpop.f32.mrb[0].mxu0
      %1543 = vdwg.mxu0
      %1544 = vmatprep.subr.bf16.mxu0 0
      %1545 = vmatpush1.bf16.msra.mxu0 %v823
      %1546 = vmatprep.subr.bf16.mxu0 0
      %1547 = vmatpush1.bf16.msra.mxu0 %v830
      %1548 = vmatprep.subr.bf16.mxu0 0
      %1549 = vmatpush1.bf16.msra.mxu0 %v837
      %1550 = vmatprep.subr.bf16.mxu0 0
      %1551 = vmatpush1.bf16.msra.mxu0 %v844
      %1552 = vmatprep.subr.bf16.mxu0 0
      %1553 = vmatpush1.bf16.msra.mxu0 %v851
      %1554 = vmatprep.subr.bf16.mxu0 0
      %1555 = vmatpush1.bf16.msra.mxu0 %v858
      %1556 = vmatprep.subr.bf16.mxu0 0
      %1557 = vmatpush1.bf16.msra.mxu0 %v865
      %1558 = vmatprep.subr.bf16.mxu0 0
      %1559 = vmatpush1.bf16.msra.mxu0 %v872
      %1560 = vmatprep.subr.bf16.mxu0 0
      %1561 = vmatpush1.bf16.msra.mxu0 0
      %1562 = vmatprep.subr.bf16.mxu0 0
      %1563 = vmatpush1.bf16.msra.mxu0 0
      %1564 = vmatprep.subr.bf16.mxu0 0
      %1565 = vmatpush1.bf16.msra.mxu0 0
      %1566 = vmatprep.subr.bf16.mxu0 0
      %1567 = vmatpush1.bf16.msra.mxu0 0
      %1568 = vmatprep.subr.bf16.mxu0 0
      %1569 = vmatpush1.bf16.msra.mxu0 0
      %1570 = vmatprep.subr.bf16.mxu0 0
      %1571 = vmatpush1.bf16.msra.mxu0 0
      %1572 = vmatprep.subr.bf16.mxu0 0
      %1573 = vmatpush1.bf16.msra.mxu0 0
      %1574 = vmatprep.subr.bf16.mxu0 0
      %1575 = vmatpush1.bf16.msra.mxu0 0
      %1576 = vmatprep.mubr.bf16.mxu0 0
      %1577 = vmatmul.mubr.bf16.gmra.mrb[0].mxu0 %v605
      %v1578 = vpop.f32.mrb[0].mxu0
      %v1579 = vpop.f32.mrb[0].mxu0
      %v1580 = vpop.f32.mrb[0].mxu0
      %v1581 = vpop.f32.mrb[0].mxu0
      %1582 = vmatprep.mubr.bf16.mxu0 0
      %1583 = vmatmul.mubr.bf16.gmra.mrb[0].mxu0 %v606
      %v1584 = vpop.f32.mrb[0].mxu0
      %v1585 = vadd.f32 0.0, %v1584
      %v1586 = vpop.f32.mrb[0].mxu0
      %v1587 = vpop.f32.mrb[0].mxu0
      %v1588 = vadd.f32 0.0, %v1587
      %v1589 = vpop.f32.mrb[0].mxu0
      %1590 = vmatprep.mubr.bf16.mxu0 0
      %1591 = vmatmul.mubr.bf16.gmra.mrb[0].mxu0 %v607
      %v1592 = vpop.f32.mrb[0].mxu0
      %v1593 = vadd.f32 0.0, %v1592
      %v1594 = vpop.f32.mrb[0].mxu0
      %v1595 = vpop.f32.mrb[0].mxu0
      %v1596 = vadd.f32 0.0, %v1595
      %v1597 = vpop.f32.mrb[0].mxu0
      %1598 = vmatprep.mubr.bf16.mxu0 0
      %1599 = vmatmul.mubr.bf16.gmra.mrb[0].mxu0 %v608
      %v1600 = vpop.f32.mrb[0].mxu0
      %v1601 = vadd.f32 0.0, %v1600
      %v1602 = vpop.f32.mrb[0].mxu0
      %v1603 = vpop.f32.mrb[0].mxu0
      %v1604 = vadd.f32 0.0, %v1603
      %v1605 = vpop.f32.mrb[0].mxu0
      %1606 = vmatprep.mubr.bf16.mxu0 0
      %1607 = vmatmul.mubr.bf16.gmra.mrb[0].mxu0 %v609
      %v1608 = vpop.f32.mrb[0].mxu0
      %v1609 = vadd.f32 0.0, %v1608
      %v1610 = vpop.f32.mrb[0].mxu0
      %v1611 = vpop.f32.mrb[0].mxu0
      %v1612 = vadd.f32 0.0, %v1611
      %v1613 = vpop.f32.mrb[0].mxu0
      %1614 = vmatprep.mubr.bf16.mxu0 0
      %1615 = vmatmul.mubr.bf16.gmra.mrb[0].mxu0 %v610
      %v1616 = vpop.f32.mrb[0].mxu0
      %v1617 = vadd.f32 0.0, %v1616
      %v1618 = vpop.f32.mrb[0].mxu0
      %v1619 = vpop.f32.mrb[0].mxu0
      %v1620 = vadd.f32 0.0, %v1619
      %v1621 = vpop.f32.mrb[0].mxu0
      %1622 = vmatprep.mubr.bf16.mxu0 0
      %1623 = vmatmul.mubr.bf16.gmra.mrb[0].mxu0 %v611
      %v1624 = vpop.f32.mrb[0].mxu0
      %v1625 = vadd.f32 0.0, %v1624
      %v1626 = vpop.f32.mrb[0].mxu0
      %v1627 = vpop.f32.mrb[0].mxu0
      %v1628 = vadd.f32 0.0, %v1627
      %v1629 = vpop.f32.mrb[0].mxu0
      %1630 = vmatprep.mubr.bf16.mxu0 0
      %1631 = vmatmul.mubr.bf16.gmra.mrb[0].mxu0 %v612
      %v1632 = vpop.f32.mrb[0].mxu0
      %v1633 = vadd.f32 0.0, %v1632
      %v1634 = vpop.f32.mrb[0].mxu0
      %v1635 = vpop.f32.mrb[0].mxu0
      %v1636 = vadd.f32 0.0, %v1635
      %v1637 = vpop.f32.mrb[0].mxu0
      %1638 = vmatprep.mubr.bf16.mxu0 0
      %1639 = vmatmul.mubr.bf16.gmra.mrb[0].mxu0 %v613
      %v1640 = vpop.f32.mrb[0].mxu0
      %v1641 = vadd.f32 0.0, %v1640
      %v1642 = vpop.f32.mrb[0].mxu0
      %v1643 = vpop.f32.mrb[0].mxu0
      %v1644 = vadd.f32 0.0, %v1643
      %v1645 = vpop.f32.mrb[0].mxu0
      %1646 = vmatprep.mubr.bf16.mxu0 0
      %1647 = vmatmul.mubr.bf16.gmra.mrb[0].mxu0 %v614
      %v1648 = vpop.f32.mrb[0].mxu0
      %v1649 = vadd.f32 0.0, %v1648
      %v1650 = vpop.f32.mrb[0].mxu0
      %v1651 = vpop.f32.mrb[0].mxu0
      %v1652 = vadd.f32 0.0, %v1651
      %v1653 = vpop.f32.mrb[0].mxu0
      %1654 = vmatprep.mubr.bf16.mxu0 0
      %1655 = vmatmul.mubr.bf16.gmra.mrb[0].mxu0 %v615
      %v1656 = vpop.f32.mrb[0].mxu0
      %v1657 = vadd.f32 0.0, %v1656
      %v1658 = vpop.f32.mrb[0].mxu0
      %v1659 = vpop.f32.mrb[0].mxu0
      %v1660 = vadd.f32 0.0, %v1659
      %v1661 = vpop.f32.mrb[0].mxu0
      %1662 = vmatprep.mubr.bf16.mxu0 0
      %1663 = vmatmul.mubr.bf16.gmra.mrb[0].mxu0 %v616
      %v1664 = vpop.f32.mrb[0].mxu0
      %v1665 = vadd.f32 0.0, %v1664
      %v1666 = vpop.f32.mrb[0].mxu0
      %v1667 = vpop.f32.mrb[0].mxu0
      %v1668 = vadd.f32 0.0, %v1667
      %v1669 = vpop.f32.mrb[0].mxu0
      %1670 = vmatprep.mubr.bf16.mxu0 0
      %1671 = vmatmul.mubr.bf16.gmra.mrb[0].mxu0 %v617
      %v1672 = vpop.f32.mrb[0].mxu0
      %v1673 = vadd.f32 0.0, %v1672
      %v1674 = vpop.f32.mrb[0].mxu0
      %v1675 = vpop.f32.mrb[0].mxu0
      %v1676 = vadd.f32 0.0, %v1675
      %v1677 = vpop.f32.mrb[0].mxu0
      %1678 = vmatprep.mubr.bf16.mxu0 0
      %1679 = vmatmul.mubr.bf16.gmra.mrb[0].mxu0 %v618
      %v1680 = vpop.f32.mrb[0].mxu0
      %v1681 = vadd.f32 0.0, %v1680
      %v1682 = vpop.f32.mrb[0].mxu0
      %v1683 = vpop.f32.mrb[0].mxu0
      %v1684 = vadd.f32 0.0, %v1683
      %v1685 = vpop.f32.mrb[0].mxu0
      %1686 = vmatprep.mubr.bf16.mxu0 0
      %1687 = vmatmul.mubr.bf16.gmra.mrb[0].mxu0 %v619
      %v1688 = vpop.f32.mrb[0].mxu0
      %v1689 = vadd.f32 0.0, %v1688
      %v1690 = vpop.f32.mrb[0].mxu0
      %v1691 = vpop.f32.mrb[0].mxu0
      %v1692 = vadd.f32 0.0, %v1691
      %v1693 = vpop.f32.mrb[0].mxu0
      %1694 = vmatprep.mubr.bf16.mxu0 0
      %1695 = vmatmul.mubr.bf16.gmra.mrb[0].mxu0 %v620
      %v1696 = vpop.f32.mrb[0].mxu0
      %v1697 = vadd.f32 0.0, %v1696
      %v1698 = vpop.f32.mrb[0].mxu0
      %v1699 = vpop.f32.mrb[0].mxu0
      %v1700 = vadd.f32 0.0, %v1699
      %v1701 = vpop.f32.mrb[0].mxu0
      %1702 = vmatprep.mubr.bf16.mxu0 0
      %1703 = vmatmul.mubr.bf16.gmra.mrb[0].mxu0 %v621
      %v1704 = vpop.f32.mrb[0].mxu0
      %v1705 = vadd.f32 0.0, %v1704
      %v1706 = vpop.f32.mrb[0].mxu0
      %v1707 = vpop.f32.mrb[0].mxu0
      %v1708 = vadd.f32 0.0, %v1707
      %v1709 = vpop.f32.mrb[0].mxu0
      %1710 = vmatprep.mubr.bf16.mxu0 0
      %1711 = vmatmul.mubr.bf16.gmra.mrb[0].mxu0 %v622
      %v1712 = vpop.f32.mrb[0].mxu0
      %v1713 = vpop.f32.mrb[0].mxu0
      %v1714 = vpop.f32.mrb[0].mxu0
      %v1715 = vpop.f32.mrb[0].mxu0
      %1716 = vdwg.mxu0
      %v1717 = vadd.f32 %v964, %v974
      %v1718 = vadd.f32 %v967, %v978
      %v1719 = vadd.f32 %v972, %v984
      %v1720 = vadd.f32 %v976, %v988
      %v1721 = vadd.f32 %v982, %v994
      %v1722 = vadd.f32 %v986, %v998
      %v1723 = vadd.f32 %v992, %v1004
      %v1724 = vadd.f32 %v996, %v1008
      %v1725 = vadd.f32 %v1002, %v1014
      %v1726 = vadd.f32 %v1006, %v1018
      %v1727 = vadd.f32 %v1012, %v1024
      %v1728 = vadd.f32 %v1016, %v1028
      %v1729 = vadd.f32 %v1022, %v1034
      %v1730 = vadd.f32 %v1026, %v1038
      %v1731 = vadd.f32 %v1032, %v1044
      %v1732 = vadd.f32 %v1036, %v1048
      %v1733 = vadd.f32 %v1042, %v1054
      %v1734 = vadd.f32 %v1046, %v1058
      %v1735 = vadd.f32 %v1052, %v1064
      %v1736 = vadd.f32 %v1056, %v1068
      %v1737 = vadd.f32 %v1062, %v1074
      %v1738 = vadd.f32 %v1066, %v1078
      %v1739 = vadd.f32 %v1072, %v1084
      %v1740 = vadd.f32 %v1076, %v1088
      %v1741 = vadd.f32 %v1082, %v1094
      %v1742 = vadd.f32 %v1086, %v1098
      %v1743 = vadd.f32 %v1092, %v1104
      %v1744 = vadd.f32 %v1096, %v1108
      %v1745 = vadd.f32 %v1102, %v1114
      %v1746 = vadd.f32 %v1106, %v1118
      %v1747 = vadd.f32 %v1112, %v1123
      %v1748 = vadd.f32 %v1116, %v1126
      %v1749 = vadd.f32 %v1717, %v1183
      %v1750 = vadd.f32 %v1718, %v1187
      %v1751 = vadd.f32 %v1719, %v1193
      %v1752 = vadd.f32 %v1720, %v1197
      %v1753 = vadd.f32 %v1721, %v1203
      %v1754 = vadd.f32 %v1722, %v1207
      %v1755 = vadd.f32 %v1723, %v1213
      %v1756 = vadd.f32 %v1724, %v1217
      %v1757 = vadd.f32 %v1725, %v1223
      %v1758 = vadd.f32 %v1726, %v1227
      %v1759 = vadd.f32 %v1727, %v1233
      %v1760 = vadd.f32 %v1728, %v1237
      %v1761 = vadd.f32 %v1729, %v1243
      %v1762 = vadd.f32 %v1730, %v1247
      %v1763 = vadd.f32 %v1731, %v1253
      %v1764 = vadd.f32 %v1732, %v1257
      %v1765 = vadd.f32 %v1733, %v1263
      %v1766 = vadd.f32 %v1734, %v1267
      %v1767 = vadd.f32 %v1735, %v1273
      %v1768 = vadd.f32 %v1736, %v1277
      %v1769 = vadd.f32 %v1737, %v1283
      %v1770 = vadd.f32 %v1738, %v1287
      %v1771 = vadd.f32 %v1739, %v1293
      %v1772 = vadd.f32 %v1740, %v1297
      %v1773 = vadd.f32 %v1741, %v1303
      %v1774 = vadd.f32 %v1742, %v1307
      %v1775 = vadd.f32 %v1743, %v1313
      %v1776 = vadd.f32 %v1744, %v1317
      %v1777 = vadd.f32 %v1745, %v1323
      %v1778 = vadd.f32 %v1746, %v1327
      %v1779 = vadd.f32 %v1747, %v1333
      %v1780 = vadd.f32 %v1748, %v1336
      %v1781 = vld [vmem:[%s4] sm:$0x1]
      %v1783 = vlaneseq
      %v1784 = vshrl.u32 %v1783, 7
      %v1785 = vsub.s32 0, %v1784
      %v1786 = vrot.slane %v1781, %v1785
      %v1788 = vadd.f32 %v1749, %v1786
      %v1789 = vadd.f32 %v1750, %v1786
      %v1790 = vadd.f32 %v1751, %v1786
      %v1791 = vadd.f32 %v1752, %v1786
      %v1792 = vadd.f32 %v1753, %v1786
      %v1793 = vadd.f32 %v1754, %v1786
      %v1794 = vadd.f32 %v1755, %v1786
      %v1795 = vadd.f32 %v1756, %v1786
      %v1796 = vadd.f32 %v1757, %v1786
      %v1797 = vadd.f32 %v1758, %v1786
      %v1798 = vadd.f32 %v1759, %v1786
      %v1799 = vadd.f32 %v1760, %v1786
      %v1800 = vadd.f32 %v1761, %v1786
      %v1801 = vadd.f32 %v1762, %v1786
      %v1802 = vadd.f32 %v1763, %v1786
      %v1803 = vadd.f32 %v1764, %v1786
      %v1804 = vadd.f32 %v1765, %v1786
      %v1805 = vadd.f32 %v1766, %v1786
      %v1806 = vadd.f32 %v1767, %v1786
      %v1807 = vadd.f32 %v1768, %v1786
      %v1808 = vadd.f32 %v1769, %v1786
      %v1809 = vadd.f32 %v1770, %v1786
      %v1810 = vadd.f32 %v1771, %v1786
      %v1811 = vadd.f32 %v1772, %v1786
      %v1812 = vadd.f32 %v1773, %v1786
      %v1813 = vadd.f32 %v1774, %v1786
      %v1814 = vadd.f32 %v1775, %v1786
      %v1815 = vadd.f32 %v1776, %v1786
      %v1816 = vadd.f32 %v1777, %v1786
      %v1817 = vadd.f32 %v1778, %v1786
      %v1818 = vadd.f32 %v1779, %v1786
      %v1819 = vadd.f32 %v1780, %v1786
      %s1820 = scalar_lea.vmem %s4, 1
      %v1821 = vld [vmem:[%s1820] sm:$0x1]
      %v1838 = vrot.slane %v1382, 1
      %v1839 = vrot.slane %v1392, 1
      %v1840 = vrot.slane %v1402, 1
      %v1841 = vrot.slane %v1412, 1
      %v1842 = vrot.slane %v1422, 1
      %v1843 = vrot.slane %v1432, 1
      %v1844 = vrot.slane %v1442, 1
      %v1845 = vrot.slane %v1452, 1
      %v1846 = vrot.slane %v1462, 1
      %v1847 = vrot.slane %v1472, 1
      %v1848 = vrot.slane %v1482, 1
      %v1849 = vrot.slane %v1492, 1
      %v1850 = vrot.slane %v1502, 1
      %v1851 = vrot.slane %v1512, 1
      %v1852 = vrot.slane %v1522, 1
      %v1853 = vrot.slane %v1532, 1
      %v1870 = vadd.f32 %v1380, %v1838
      %v1871 = vadd.f32 %v1390, %v1839
      %v1872 = vadd.f32 %v1400, %v1840
      %v1873 = vadd.f32 %v1410, %v1841
      %v1874 = vadd.f32 %v1420, %v1842
      %v1875 = vadd.f32 %v1430, %v1843
      %v1876 = vadd.f32 %v1440, %v1844
      %v1877 = vadd.f32 %v1450, %v1845
      %v1878 = vadd.f32 %v1460, %v1846
      %v1879 = vadd.f32 %v1470, %v1847
      %v1880 = vadd.f32 %v1480, %v1848
      %v1881 = vadd.f32 %v1490, %v1849
      %v1882 = vadd.f32 %v1500, %v1850
      %v1883 = vadd.f32 %v1510, %v1851
      %v1884 = vadd.f32 %v1520, %v1852
      %v1885 = vadd.f32 %v1530, %v1853
      %v1886 = vadd.f32 %v1870, %v1821
      %v1887 = vadd.f32 %v1871, %v1821
      %v1888 = vadd.f32 %v1872, %v1821
      %v1889 = vadd.f32 %v1873, %v1821
      %v1890 = vadd.f32 %v1874, %v1821
      %v1891 = vadd.f32 %v1875, %v1821
      %v1892 = vadd.f32 %v1876, %v1821
      %v1893 = vadd.f32 %v1877, %v1821
      %v1894 = vadd.f32 %v1878, %v1821
      %v1895 = vadd.f32 %v1879, %v1821
      %v1896 = vadd.f32 %v1880, %v1821
      %v1897 = vadd.f32 %v1881, %v1821
      %v1898 = vadd.f32 %v1882, %v1821
      %v1899 = vadd.f32 %v1883, %v1821
      %v1900 = vadd.f32 %v1884, %v1821
      %v1901 = vadd.f32 %v1885, %v1821
      %vm1934 = vcmask 1040384
      %v1935 = vrot.slane %v1176, 7
      %v1936 = vrot.slane %v1179, 7
      %v1937 = vsel %vm1934, %v1935, %v1936
      %v1938 = vrot.slane %v1185, 7
      %v1939 = vrot.slane %v1189, 7
      %v1940 = vsel %vm1934, %v1938, %v1939
      %v1941 = vrot.slane %v1195, 7
      %v1942 = vrot.slane %v1199, 7
      %v1943 = vsel %vm1934, %v1941, %v1942
      %v1944 = vrot.slane %v1205, 7
      %v1945 = vrot.slane %v1209, 7
      %v1946 = vsel %vm1934, %v1944, %v1945
      %v1947 = vrot.slane %v1215, 7
      %v1948 = vrot.slane %v1219, 7
      %v1949 = vsel %vm1934, %v1947, %v1948
      %v1950 = vrot.slane %v1225, 7
      %v1951 = vrot.slane %v1229, 7
      %v1952 = vsel %vm1934, %v1950, %v1951
      %v1953 = vrot.slane %v1235, 7
      %v1954 = vrot.slane %v1239, 7
      %v1955 = vsel %vm1934, %v1953, %v1954
      %v1956 = vrot.slane %v1245, 7
      %v1957 = vrot.slane %v1249, 7
      %v1958 = vsel %vm1934, %v1956, %v1957
      %v1959 = vrot.slane %v1255, 7
      %v1960 = vrot.slane %v1259, 7
      %v1961 = vsel %vm1934, %v1959, %v1960
      %v1962 = vrot.slane %v1265, 7
      %v1963 = vrot.slane %v1269, 7
      %v1964 = vsel %vm1934, %v1962, %v1963
      %v1965 = vrot.slane %v1275, 7
      %v1966 = vrot.slane %v1279, 7
      %v1967 = vsel %vm1934, %v1965, %v1966
      %v1968 = vrot.slane %v1285, 7
      %v1969 = vrot.slane %v1289, 7
      %v1970 = vsel %vm1934, %v1968, %v1969
      %v1971 = vrot.slane %v1295, 7
      %v1972 = vrot.slane %v1299, 7
      %v1973 = vsel %vm1934, %v1971, %v1972
      %v1974 = vrot.slane %v1305, 7
      %v1975 = vrot.slane %v1309, 7
      %v1976 = vsel %vm1934, %v1974, %v1975
      %v1977 = vrot.slane %v1315, 7
      %v1978 = vrot.slane %v1319, 7
      %v1979 = vsel %vm1934, %v1977, %v1978
      %v1980 = vrot.slane %v1325, 7
      %v1981 = vrot.slane %v1329, 7
      %v1982 = vsel %vm1934, %v1980, %v1981
      %v2015 = vadd.f32 %v1380, %v1935
      %v2016 = vadd.f32 %v1384, %v1937
      %v2017 = vadd.f32 %v1390, %v1938
      %v2018 = vadd.f32 %v1394, %v1940
      %v2019 = vadd.f32 %v1400, %v1941
      %v2020 = vadd.f32 %v1404, %v1943
      %v2021 = vadd.f32 %v1410, %v1944
      %v2022 = vadd.f32 %v1414, %v1946
      %v2023 = vadd.f32 %v1420, %v1947
      %v2024 = vadd.f32 %v1424, %v1949
      %v2025 = vadd.f32 %v1430, %v1950
      %v2026 = vadd.f32 %v1434, %v1952
      %v2027 = vadd.f32 %v1440, %v1953
      %v2028 = vadd.f32 %v1444, %v1955
      %v2029 = vadd.f32 %v1450, %v1956
      %v2030 = vadd.f32 %v1454, %v1958
      %v2031 = vadd.f32 %v1460, %v1959
      %v2032 = vadd.f32 %v1464, %v1961
      %v2033 = vadd.f32 %v1470, %v1962
      %v2034 = vadd.f32 %v1474, %v1964
      %v2035 = vadd.f32 %v1480, %v1965
      %v2036 = vadd.f32 %v1484, %v1967
      %v2037 = vadd.f32 %v1490, %v1968
      %v2038 = vadd.f32 %v1494, %v1970
      %v2039 = vadd.f32 %v1500, %v1971
      %v2040 = vadd.f32 %v1504, %v1973
      %v2041 = vadd.f32 %v1510, %v1974
      %v2042 = vadd.f32 %v1514, %v1976
      %v2043 = vadd.f32 %v1520, %v1977
      %v2044 = vadd.f32 %v1524, %v1979
      %v2045 = vadd.f32 %v1530, %v1980
      %v2046 = vadd.f32 %v1534, %v1982
      %vm2063 = vcmask 1046528
      %v2064 = vrot.slane %v1386, 1
      %v2065 = vsel %vm2063, %v1838, %v2064
      %v2066 = vrot.slane %v1396, 1
      %v2067 = vsel %vm2063, %v1839, %v2066
      %v2068 = vrot.slane %v1406, 1
      %v2069 = vsel %vm2063, %v1840, %v2068
      %v2070 = vrot.slane %v1416, 1
      %v2071 = vsel %vm2063, %v1841, %v2070
      %v2072 = vrot.slane %v1426, 1
      %v2073 = vsel %vm2063, %v1842, %v2072
      %v2074 = vrot.slane %v1436, 1
      %v2075 = vsel %vm2063, %v1843, %v2074
      %v2076 = vrot.slane %v1446, 1
      %v2077 = vsel %vm2063, %v1844, %v2076
      %v2078 = vrot.slane %v1456, 1
      %v2079 = vsel %vm2063, %v1845, %v2078
      %v2080 = vrot.slane %v1466, 1
      %v2081 = vsel %vm2063, %v1846, %v2080
      %v2082 = vrot.slane %v1476, 1
      %v2083 = vsel %vm2063, %v1847, %v2082
      %v2084 = vrot.slane %v1486, 1
      %v2085 = vsel %vm2063, %v1848, %v2084
      %v2086 = vrot.slane %v1496, 1
      %v2087 = vsel %vm2063, %v1849, %v2086
      %v2088 = vrot.slane %v1506, 1
      %v2089 = vsel %vm2063, %v1850, %v2088
      %v2090 = vrot.slane %v1516, 1
      %v2091 = vsel %vm2063, %v1851, %v2090
      %v2092 = vrot.slane %v1526, 1
      %v2093 = vsel %vm2063, %v1852, %v2092
      %v2094 = vrot.slane %v1536, 1
      %v2095 = vsel %vm2063, %v1853, %v2094
      %v2128 = vadd.f32 %v2015, %v2065
      %v2129 = vadd.f32 %v2016, %v2064
      %v2130 = vadd.f32 %v2017, %v2067
      %v2131 = vadd.f32 %v2018, %v2066
      %v2132 = vadd.f32 %v2019, %v2069
      %v2133 = vadd.f32 %v2020, %v2068
      %v2134 = vadd.f32 %v2021, %v2071
      %v2135 = vadd.f32 %v2022, %v2070
      %v2136 = vadd.f32 %v2023, %v2073
      %v2137 = vadd.f32 %v2024, %v2072
      %v2138 = vadd.f32 %v2025, %v2075
      %v2139 = vadd.f32 %v2026, %v2074
      %v2140 = vadd.f32 %v2027, %v2077
      %v2141 = vadd.f32 %v2028, %v2076
      %v2142 = vadd.f32 %v2029, %v2079
      %v2143 = vadd.f32 %v2030, %v2078
      %v2144 = vadd.f32 %v2031, %v2081
      %v2145 = vadd.f32 %v2032, %v2080
      %v2146 = vadd.f32 %v2033, %v2083
      %v2147 = vadd.f32 %v2034, %v2082
      %v2148 = vadd.f32 %v2035, %v2085
      %v2149 = vadd.f32 %v2036, %v2084
      %v2150 = vadd.f32 %v2037, %v2087
      %v2151 = vadd.f32 %v2038, %v2086
      %v2152 = vadd.f32 %v2039, %v2089
      %v2153 = vadd.f32 %v2040, %v2088
      %v2154 = vadd.f32 %v2041, %v2091
      %v2155 = vadd.f32 %v2042, %v2090
      %v2156 = vadd.f32 %v2043, %v2093
      %v2157 = vadd.f32 %v2044, %v2092
      %v2158 = vadd.f32 %v2045, %v2095
      %v2159 = vadd.f32 %v2046, %v2094
      %v2161 = vlaneseq
      %v2162 = vshrl.u32 %v2161, 7
      %v2163 = vsub.s32 0, %v2162
      %v2164 = vrot.slane %v1821, %v2163
      %v2166 = vadd.f32 %v2128, %v2164
      %v2167 = vadd.f32 %v2129, %v2164
      %v2168 = vadd.f32 %v2130, %v2164
      %v2169 = vadd.f32 %v2131, %v2164
      %v2170 = vadd.f32 %v2132, %v2164
      %v2171 = vadd.f32 %v2133, %v2164
      %v2172 = vadd.f32 %v2134, %v2164
      %v2173 = vadd.f32 %v2135, %v2164
      %v2174 = vadd.f32 %v2136, %v2164
      %v2175 = vadd.f32 %v2137, %v2164
      %v2176 = vadd.f32 %v2138, %v2164
      %v2177 = vadd.f32 %v2139, %v2164
      %v2178 = vadd.f32 %v2140, %v2164
      %v2179 = vadd.f32 %v2141, %v2164
      %v2180 = vadd.f32 %v2142, %v2164
      %v2181 = vadd.f32 %v2143, %v2164
      %v2182 = vadd.f32 %v2144, %v2164
      %v2183 = vadd.f32 %v2145, %v2164
      %v2184 = vadd.f32 %v2146, %v2164
      %v2185 = vadd.f32 %v2147, %v2164
      %v2186 = vadd.f32 %v2148, %v2164
      %v2187 = vadd.f32 %v2149, %v2164
      %v2188 = vadd.f32 %v2150, %v2164
      %v2189 = vadd.f32 %v2151, %v2164
      %v2190 = vadd.f32 %v2152, %v2164
      %v2191 = vadd.f32 %v2153, %v2164
      %v2192 = vadd.f32 %v2154, %v2164
      %v2193 = vadd.f32 %v2155, %v2164
      %v2194 = vadd.f32 %v2156, %v2164
      %v2195 = vadd.f32 %v2157, %v2164
      %v2196 = vadd.f32 %v2158, %v2164
      %v2197 = vadd.f32 %v2159, %v2164
      %v2214 = vadd.f32 %v1384, %v1936
      %v2215 = vadd.f32 %v1394, %v1939
      %v2216 = vadd.f32 %v1404, %v1942
      %v2217 = vadd.f32 %v1414, %v1945
      %v2218 = vadd.f32 %v1424, %v1948
      %v2219 = vadd.f32 %v1434, %v1951
      %v2220 = vadd.f32 %v1444, %v1954
      %v2221 = vadd.f32 %v1454, %v1957
      %v2222 = vadd.f32 %v1464, %v1960
      %v2223 = vadd.f32 %v1474, %v1963
      %v2224 = vadd.f32 %v1484, %v1966
      %v2225 = vadd.f32 %v1494, %v1969
      %v2226 = vadd.f32 %v1504, %v1972
      %v2227 = vadd.f32 %v1514, %v1975
      %v2228 = vadd.f32 %v1524, %v1978
      %v2229 = vadd.f32 %v1534, %v1981
      %v2230 = vadd.f32 %v2214, %v2164
      %v2231 = vadd.f32 %v2215, %v2164
      %v2232 = vadd.f32 %v2216, %v2164
      %v2233 = vadd.f32 %v2217, %v2164
      %v2234 = vadd.f32 %v2218, %v2164
      %v2235 = vadd.f32 %v2219, %v2164
      %v2236 = vadd.f32 %v2220, %v2164
      %v2237 = vadd.f32 %v2221, %v2164
      %v2238 = vadd.f32 %v2222, %v2164
      %v2239 = vadd.f32 %v2223, %v2164
      %v2240 = vadd.f32 %v2224, %v2164
      %v2241 = vadd.f32 %v2225, %v2164
      %v2242 = vadd.f32 %v2226, %v2164
      %v2243 = vadd.f32 %v2227, %v2164
      %v2244 = vadd.f32 %v2228, %v2164
      %v2245 = vadd.f32 %v2229, %v2164
      %v2246 = vsel %vm1934, %v1886, %v2166
      %v2247 = vsel %vm1934, %v1887, %v2168
      %v2248 = vsel %vm1934, %v1888, %v2170
      %v2249 = vsel %vm1934, %v1889, %v2172
      %v2250 = vsel %vm1934, %v1890, %v2174
      %v2251 = vsel %vm1934, %v1891, %v2176
      %v2252 = vsel %vm1934, %v1892, %v2178
      %v2253 = vsel %vm1934, %v1893, %v2180
      %v2254 = vsel %vm1934, %v1894, %v2182
      %v2255 = vsel %vm1934, %v1895, %v2184
      %v2256 = vsel %vm1934, %v1896, %v2186
      %v2257 = vsel %vm1934, %v1897, %v2188
      %v2258 = vsel %vm1934, %v1898, %v2190
      %v2259 = vsel %vm1934, %v1899, %v2192
      %v2260 = vsel %vm1934, %v1900, %v2194
      %v2261 = vsel %vm1934, %v1901, %v2196
      %v2262 = vsel %vm2063, %v2167, %v2230
      %v2263 = vsel %vm2063, %v2169, %v2231
      %v2264 = vsel %vm2063, %v2171, %v2232
      %v2265 = vsel %vm2063, %v2173, %v2233
      %v2266 = vsel %vm2063, %v2175, %v2234
      %v2267 = vsel %vm2063, %v2177, %v2235
      %v2268 = vsel %vm2063, %v2179, %v2236
      %v2269 = vsel %vm2063, %v2181, %v2237
      %v2270 = vsel %vm2063, %v2183, %v2238
      %v2271 = vsel %vm2063, %v2185, %v2239
      %v2272 = vsel %vm2063, %v2187, %v2240
      %v2273 = vsel %vm2063, %v2189, %v2241
      %v2274 = vsel %vm2063, %v2191, %v2242
      %v2275 = vsel %vm2063, %v2193, %v2243
      %v2276 = vsel %vm2063, %v2195, %v2244
      %v2277 = vsel %vm2063, %v2197, %v2245
      %s2278 = scalar_lea.vmem %s4, 2
      %v2279 = vld [vmem:[%s2278] sm:$0x1]
      %v2281 = vlaneseq
      %v2282 = vshrl.u32 %v2281, 7
      %v2283 = vsub.s32 0, %v2282
      %v2284 = vrot.slane %v2279, %v2283
      %v2286 = vadd.f32 %v1585, %v2284
      %v2287 = vadd.f32 %v1588, %v2284
      %v2288 = vadd.f32 %v1593, %v2284
      %v2289 = vadd.f32 %v1596, %v2284
      %v2290 = vadd.f32 %v1601, %v2284
      %v2291 = vadd.f32 %v1604, %v2284
      %v2292 = vadd.f32 %v1609, %v2284
      %v2293 = vadd.f32 %v1612, %v2284
      %v2294 = vadd.f32 %v1617, %v2284
      %v2295 = vadd.f32 %v1620, %v2284
      %v2296 = vadd.f32 %v1625, %v2284
      %v2297 = vadd.f32 %v1628, %v2284
      %v2298 = vadd.f32 %v1633, %v2284
      %v2299 = vadd.f32 %v1636, %v2284
      %v2300 = vadd.f32 %v1641, %v2284
      %v2301 = vadd.f32 %v1644, %v2284
      %v2302 = vadd.f32 %v1649, %v2284
      %v2303 = vadd.f32 %v1652, %v2284
      %v2304 = vadd.f32 %v1657, %v2284
      %v2305 = vadd.f32 %v1660, %v2284
      %v2306 = vadd.f32 %v1665, %v2284
      %v2307 = vadd.f32 %v1668, %v2284
      %v2308 = vadd.f32 %v1673, %v2284
      %v2309 = vadd.f32 %v1676, %v2284
      %v2310 = vadd.f32 %v1681, %v2284
      %v2311 = vadd.f32 %v1684, %v2284
      %v2312 = vadd.f32 %v1689, %v2284
      %v2313 = vadd.f32 %v1692, %v2284
      %v2314 = vadd.f32 %v1697, %v2284
      %v2315 = vadd.f32 %v1700, %v2284
      %v2316 = vadd.f32 %v1705, %v2284
      %v2317 = vadd.f32 %v1708, %v2284
      %v2318 = vpack.c.bf16 %v1789, %v1788
      %v2319 = vpack.c.bf16 %v1791, %v1790
      %v2320 = vpack.c.bf16 %v1793, %v1792
      %v2321 = vpack.c.bf16 %v1795, %v1794
      %v2322 = vpack.c.bf16 %v1797, %v1796
      %v2323 = vpack.c.bf16 %v1799, %v1798
      %v2324 = vpack.c.bf16 %v1801, %v1800
      %v2325 = vpack.c.bf16 %v1803, %v1802
      %v2326 = vpack.c.bf16 %v1805, %v1804
      %v2327 = vpack.c.bf16 %v1807, %v1806
      %v2328 = vpack.c.bf16 %v1809, %v1808
      %v2329 = vpack.c.bf16 %v1811, %v1810
      %v2330 = vpack.c.bf16 %v1813, %v1812
      %v2331 = vpack.c.bf16 %v1815, %v1814
      %v2332 = vpack.c.bf16 %v1817, %v1816
      %v2333 = vpack.c.bf16 %v1819, %v1818
      %v2334 = vxor.u32 %v2318, 2147516416
      %v2335 = vxor.u32 %v2319, 2147516416
      %v2336 = vxor.u32 %v2320, 2147516416
      %v2337 = vxor.u32 %v2321, 2147516416
      %v2338 = vxor.u32 %v2322, 2147516416
      %v2339 = vxor.u32 %v2323, 2147516416
      %v2340 = vxor.u32 %v2324, 2147516416
      %v2341 = vxor.u32 %v2325, 2147516416
      %v2342 = vxor.u32 %v2326, 2147516416
      %v2343 = vxor.u32 %v2327, 2147516416
      %v2344 = vxor.u32 %v2328, 2147516416
      %v2345 = vxor.u32 %v2329, 2147516416
      %v2346 = vxor.u32 %v2330, 2147516416
      %v2347 = vxor.u32 %v2331, 2147516416
      %v2348 = vxor.u32 %v2332, 2147516416
      %v2349 = vxor.u32 %v2333, 2147516416
      %v2351 = vmul.bf16 %v2334, 1069105081
      %v2352 = vpow.bf16.pop %v2351
      %v2354 = vmul.bf16 %v2335, 1069105081
      %v2355 = vpow.bf16.pop %v2354
      %v2357 = vmul.bf16 %v2336, 1069105081
      %v2358 = vpow.bf16.pop %v2357
      %v2360 = vmul.bf16 %v2337, 1069105081
      %v2361 = vpow.bf16.pop %v2360
      %v2363 = vmul.bf16 %v2338, 1069105081
      %v2364 = vpow.bf16.pop %v2363
      %v2366 = vmul.bf16 %v2339, 1069105081
      %v2367 = vpow.bf16.pop %v2366
      %v2369 = vmul.bf16 %v2340, 1069105081
      %v2370 = vpow.bf16.pop %v2369
      %v2372 = vmul.bf16 %v2341, 1069105081
      %v2373 = vpow.bf16.pop %v2372
      %v2375 = vmul.bf16 %v2342, 1069105081
      %v2376 = vpow.bf16.pop %v2375
      %v2378 = vmul.bf16 %v2343, 1069105081
      %v2379 = vpow.bf16.pop %v2378
      %v2381 = vmul.bf16 %v2344, 1069105081
      %v2382 = vpow.bf16.pop %v2381
      %v2384 = vmul.bf16 %v2345, 1069105081
      %v2385 = vpow.bf16.pop %v2384
      %v2387 = vmul.bf16 %v2346, 1069105081
      %v2388 = vpow.bf16.pop %v2387
      %v2390 = vmul.bf16 %v2347, 1069105081
      %v2391 = vpow.bf16.pop %v2390
      %v2393 = vmul.bf16 %v2348, 1069105081
      %v2394 = vpow.bf16.pop %v2393
      %v2396 = vmul.bf16 %v2349, 1069105081
      %v2397 = vpow.bf16.pop %v2396
      %v2398 = vadd.bf16 %v2352, 1065369472
      %v2399 = vadd.bf16 %v2355, 1065369472
      %v2400 = vadd.bf16 %v2358, 1065369472
      %v2401 = vadd.bf16 %v2361, 1065369472
      %v2402 = vadd.bf16 %v2364, 1065369472
      %v2403 = vadd.bf16 %v2367, 1065369472
      %v2404 = vadd.bf16 %v2370, 1065369472
      %v2405 = vadd.bf16 %v2373, 1065369472
      %v2406 = vadd.bf16 %v2376, 1065369472
      %v2407 = vadd.bf16 %v2379, 1065369472
      %v2408 = vadd.bf16 %v2382, 1065369472
      %v2409 = vadd.bf16 %v2385, 1065369472
      %v2410 = vadd.bf16 %v2388, 1065369472
      %v2411 = vadd.bf16 %v2391, 1065369472
      %v2412 = vadd.bf16 %v2394, 1065369472
      %v2413 = vadd.bf16 %v2397, 1065369472
      %v2414 = vrcp.bf16.pop %v2398
      %v2415 = vmul.bf16 1065369472, %v2414
      %v2416 = vrcp.bf16.pop %v2399
      %v2417 = vmul.bf16 1065369472, %v2416
      %v2418 = vrcp.bf16.pop %v2400
      %v2419 = vmul.bf16 1065369472, %v2418
      %v2420 = vrcp.bf16.pop %v2401
      %v2421 = vmul.bf16 1065369472, %v2420
      %v2422 = vrcp.bf16.pop %v2402
      %v2423 = vmul.bf16 1065369472, %v2422
      %v2424 = vrcp.bf16.pop %v2403
      %v2425 = vmul.bf16 1065369472, %v2424
      %v2426 = vrcp.bf16.pop %v2404
      %v2427 = vmul.bf16 1065369472, %v2426
      %v2428 = vrcp.bf16.pop %v2405
      %v2429 = vmul.bf16 1065369472, %v2428
      %v2430 = vrcp.bf16.pop %v2406
      %v2431 = vmul.bf16 1065369472, %v2430
      %v2432 = vrcp.bf16.pop %v2407
      %v2433 = vmul.bf16 1065369472, %v2432
      %v2434 = vrcp.bf16.pop %v2408
      %v2435 = vmul.bf16 1065369472, %v2434
      %v2436 = vrcp.bf16.pop %v2409
      %v2437 = vmul.bf16 1065369472, %v2436
      %v2438 = vrcp.bf16.pop %v2410
      %v2439 = vmul.bf16 1065369472, %v2438
      %v2440 = vrcp.bf16.pop %v2411
      %v2441 = vmul.bf16 1065369472, %v2440
      %v2442 = vrcp.bf16.pop %v2412
      %v2443 = vmul.bf16 1065369472, %v2442
      %v2444 = vrcp.bf16.pop %v2413
      %v2445 = vmul.bf16 1065369472, %v2444
      %v2446 = vunpack.c.l.bf16 %v2415
      %v2447 = vunpack.c.h.bf16 %v2415
      %v2448 = vunpack.c.l.bf16 %v2417
      %v2449 = vunpack.c.h.bf16 %v2417
      %v2450 = vunpack.c.l.bf16 %v2419
      %v2451 = vunpack.c.h.bf16 %v2419
      %v2452 = vunpack.c.l.bf16 %v2421
      %v2453 = vunpack.c.h.bf16 %v2421
      %v2454 = vunpack.c.l.bf16 %v2423
      %v2455 = vunpack.c.h.bf16 %v2423
      %v2456 = vunpack.c.l.bf16 %v2425
      %v2457 = vunpack.c.h.bf16 %v2425
      %v2458 = vunpack.c.l.bf16 %v2427
      %v2459 = vunpack.c.h.bf16 %v2427
      %v2460 = vunpack.c.l.bf16 %v2429
      %v2461 = vunpack.c.h.bf16 %v2429
      %v2462 = vunpack.c.l.bf16 %v2431
      %v2463 = vunpack.c.h.bf16 %v2431
      %v2464 = vunpack.c.l.bf16 %v2433
      %v2465 = vunpack.c.h.bf16 %v2433
      %v2466 = vunpack.c.l.bf16 %v2435
      %v2467 = vunpack.c.h.bf16 %v2435
      %v2468 = vunpack.c.l.bf16 %v2437
      %v2469 = vunpack.c.h.bf16 %v2437
      %v2470 = vunpack.c.l.bf16 %v2439
      %v2471 = vunpack.c.h.bf16 %v2439
      %v2472 = vunpack.c.l.bf16 %v2441
      %v2473 = vunpack.c.h.bf16 %v2441
      %v2474 = vunpack.c.l.bf16 %v2443
      %v2475 = vunpack.c.h.bf16 %v2443
      %v2476 = vunpack.c.l.bf16 %v2445
      %v2477 = vunpack.c.h.bf16 %v2445
      %v2478 = vpack.c.bf16 %v2262, %v2246
      %v2479 = vpack.c.bf16 %v2263, %v2247
      %v2480 = vpack.c.bf16 %v2264, %v2248
      %v2481 = vpack.c.bf16 %v2265, %v2249
      %v2482 = vpack.c.bf16 %v2266, %v2250
      %v2483 = vpack.c.bf16 %v2267, %v2251
      %v2484 = vpack.c.bf16 %v2268, %v2252
      %v2485 = vpack.c.bf16 %v2269, %v2253
      %v2486 = vpack.c.bf16 %v2270, %v2254
      %v2487 = vpack.c.bf16 %v2271, %v2255
      %v2488 = vpack.c.bf16 %v2272, %v2256
      %v2489 = vpack.c.bf16 %v2273, %v2257
      %v2490 = vpack.c.bf16 %v2274, %v2258
      %v2491 = vpack.c.bf16 %v2275, %v2259
      %v2492 = vpack.c.bf16 %v2276, %v2260
      %v2493 = vpack.c.bf16 %v2277, %v2261
      %v2494 = vxor.u32 %v2478, 2147516416
      %v2495 = vxor.u32 %v2479, 2147516416
      %v2496 = vxor.u32 %v2480, 2147516416
      %v2497 = vxor.u32 %v2481, 2147516416
      %v2498 = vxor.u32 %v2482, 2147516416
      %v2499 = vxor.u32 %v2483, 2147516416
      %v2500 = vxor.u32 %v2484, 2147516416
      %v2501 = vxor.u32 %v2485, 2147516416
      %v2502 = vxor.u32 %v2486, 2147516416
      %v2503 = vxor.u32 %v2487, 2147516416
      %v2504 = vxor.u32 %v2488, 2147516416
      %v2505 = vxor.u32 %v2489, 2147516416
      %v2506 = vxor.u32 %v2490, 2147516416
      %v2507 = vxor.u32 %v2491, 2147516416
      %v2508 = vxor.u32 %v2492, 2147516416
      %v2509 = vxor.u32 %v2493, 2147516416
      %v2511 = vmul.bf16 %v2494, 1069105081
      %v2512 = vpow.bf16.pop %v2511
      %v2514 = vmul.bf16 %v2495, 1069105081
      %v2515 = vpow.bf16.pop %v2514
      %v2517 = vmul.bf16 %v2496, 1069105081
      %v2518 = vpow.bf16.pop %v2517
      %v2520 = vmul.bf16 %v2497, 1069105081
      %v2521 = vpow.bf16.pop %v2520
      %v2523 = vmul.bf16 %v2498, 1069105081
      %v2524 = vpow.bf16.pop %v2523
      %v2526 = vmul.bf16 %v2499, 1069105081
      %v2527 = vpow.bf16.pop %v2526
      %v2529 = vmul.bf16 %v2500, 1069105081
      %v2530 = vpow.bf16.pop %v2529
      %v2532 = vmul.bf16 %v2501, 1069105081
      %v2533 = vpow.bf16.pop %v2532
      %v2535 = vmul.bf16 %v2502, 1069105081
      %v2536 = vpow.bf16.pop %v2535
      %v2538 = vmul.bf16 %v2503, 1069105081
      %v2539 = vpow.bf16.pop %v2538
      %v2541 = vmul.bf16 %v2504, 1069105081
      %v2542 = vpow.bf16.pop %v2541
      %v2544 = vmul.bf16 %v2505, 1069105081
      %v2545 = vpow.bf16.pop %v2544
      %v2547 = vmul.bf16 %v2506, 1069105081
      %v2548 = vpow.bf16.pop %v2547
      %v2550 = vmul.bf16 %v2507, 1069105081
      %v2551 = vpow.bf16.pop %v2550
      %v2553 = vmul.bf16 %v2508, 1069105081
      %v2554 = vpow.bf16.pop %v2553
      %v2556 = vmul.bf16 %v2509, 1069105081
      %v2557 = vpow.bf16.pop %v2556
      %v2558 = vadd.bf16 %v2512, 1065369472
      %v2559 = vadd.bf16 %v2515, 1065369472
      %v2560 = vadd.bf16 %v2518, 1065369472
      %v2561 = vadd.bf16 %v2521, 1065369472
      %v2562 = vadd.bf16 %v2524, 1065369472
      %v2563 = vadd.bf16 %v2527, 1065369472
      %v2564 = vadd.bf16 %v2530, 1065369472
      %v2565 = vadd.bf16 %v2533, 1065369472
      %v2566 = vadd.bf16 %v2536, 1065369472
      %v2567 = vadd.bf16 %v2539, 1065369472
      %v2568 = vadd.bf16 %v2542, 1065369472
      %v2569 = vadd.bf16 %v2545, 1065369472
      %v2570 = vadd.bf16 %v2548, 1065369472
      %v2571 = vadd.bf16 %v2551, 1065369472
      %v2572 = vadd.bf16 %v2554, 1065369472
      %v2573 = vadd.bf16 %v2557, 1065369472
      %v2574 = vrcp.bf16.pop %v2558
      %v2575 = vmul.bf16 1065369472, %v2574
      %v2576 = vrcp.bf16.pop %v2559
      %v2577 = vmul.bf16 1065369472, %v2576
      %v2578 = vrcp.bf16.pop %v2560
      %v2579 = vmul.bf16 1065369472, %v2578
      %v2580 = vrcp.bf16.pop %v2561
      %v2581 = vmul.bf16 1065369472, %v2580
      %v2582 = vrcp.bf16.pop %v2562
      %v2583 = vmul.bf16 1065369472, %v2582
      %v2584 = vrcp.bf16.pop %v2563
      %v2585 = vmul.bf16 1065369472, %v2584
      %v2586 = vrcp.bf16.pop %v2564
      %v2587 = vmul.bf16 1065369472, %v2586
      %v2588 = vrcp.bf16.pop %v2565
      %v2589 = vmul.bf16 1065369472, %v2588
      %v2590 = vrcp.bf16.pop %v2566
      %v2591 = vmul.bf16 1065369472, %v2590
      %v2592 = vrcp.bf16.pop %v2567
      %v2593 = vmul.bf16 1065369472, %v2592
      %v2594 = vrcp.bf16.pop %v2568
      %v2595 = vmul.bf16 1065369472, %v2594
      %v2596 = vrcp.bf16.pop %v2569
      %v2597 = vmul.bf16 1065369472, %v2596
      %v2598 = vrcp.bf16.pop %v2570
      %v2599 = vmul.bf16 1065369472, %v2598
      %v2600 = vrcp.bf16.pop %v2571
      %v2601 = vmul.bf16 1065369472, %v2600
      %v2602 = vrcp.bf16.pop %v2572
      %v2603 = vmul.bf16 1065369472, %v2602
      %v2604 = vrcp.bf16.pop %v2573
      %v2605 = vmul.bf16 1065369472, %v2604
      %v2606 = vunpack.c.l.bf16 %v2575
      %v2607 = vunpack.c.h.bf16 %v2575
      %v2608 = vunpack.c.l.bf16 %v2577
      %v2609 = vunpack.c.h.bf16 %v2577
      %v2610 = vunpack.c.l.bf16 %v2579
      %v2611 = vunpack.c.h.bf16 %v2579
      %v2612 = vunpack.c.l.bf16 %v2581
      %v2613 = vunpack.c.h.bf16 %v2581
      %v2614 = vunpack.c.l.bf16 %v2583
      %v2615 = vunpack.c.h.bf16 %v2583
      %v2616 = vunpack.c.l.bf16 %v2585
      %v2617 = vunpack.c.h.bf16 %v2585
      %v2618 = vunpack.c.l.bf16 %v2587
      %v2619 = vunpack.c.h.bf16 %v2587
      %v2620 = vunpack.c.l.bf16 %v2589
      %v2621 = vunpack.c.h.bf16 %v2589
      %v2622 = vunpack.c.l.bf16 %v2591
      %v2623 = vunpack.c.h.bf16 %v2591
      %v2624 = vunpack.c.l.bf16 %v2593
      %v2625 = vunpack.c.h.bf16 %v2593
      %v2626 = vunpack.c.l.bf16 %v2595
      %v2627 = vunpack.c.h.bf16 %v2595
      %v2628 = vunpack.c.l.bf16 %v2597
      %v2629 = vunpack.c.h.bf16 %v2597
      %v2630 = vunpack.c.l.bf16 %v2599
      %v2631 = vunpack.c.h.bf16 %v2599
      %v2632 = vunpack.c.l.bf16 %v2601
      %v2633 = vunpack.c.h.bf16 %v2601
      %v2634 = vunpack.c.l.bf16 %v2603
      %v2635 = vunpack.c.h.bf16 %v2603
      %v2636 = vunpack.c.l.bf16 %v2605
      %v2637 = vunpack.c.h.bf16 %v2605
      %v2638 = vadd.f32 %v2446, %v2606
      %v2639 = vadd.f32 %v2447, %v2607
      %v2640 = vadd.f32 %v2448, %v2608
      %v2641 = vadd.f32 %v2449, %v2609
      %v2642 = vadd.f32 %v2450, %v2610
      %v2643 = vadd.f32 %v2451, %v2611
      %v2644 = vadd.f32 %v2452, %v2612
      %v2645 = vadd.f32 %v2453, %v2613
      %v2646 = vadd.f32 %v2454, %v2614
      %v2647 = vadd.f32 %v2455, %v2615
      %v2648 = vadd.f32 %v2456, %v2616
      %v2649 = vadd.f32 %v2457, %v2617
      %v2650 = vadd.f32 %v2458, %v2618
      %v2651 = vadd.f32 %v2459, %v2619
      %v2652 = vadd.f32 %v2460, %v2620
      %v2653 = vadd.f32 %v2461, %v2621
      %v2654 = vadd.f32 %v2462, %v2622
      %v2655 = vadd.f32 %v2463, %v2623
      %v2656 = vadd.f32 %v2464, %v2624
      %v2657 = vadd.f32 %v2465, %v2625
      %v2658 = vadd.f32 %v2466, %v2626
      %v2659 = vadd.f32 %v2467, %v2627
      %v2660 = vadd.f32 %v2468, %v2628
      %v2661 = vadd.f32 %v2469, %v2629
      %v2662 = vadd.f32 %v2470, %v2630
      %v2663 = vadd.f32 %v2471, %v2631
      %v2664 = vadd.f32 %v2472, %v2632
      %v2665 = vadd.f32 %v2473, %v2633
      %v2666 = vadd.f32 %v2474, %v2634
      %v2667 = vadd.f32 %v2475, %v2635
      %v2668 = vadd.f32 %v2476, %v2636
      %v2669 = vadd.f32 %v2477, %v2637
      %v2670 = vpack.c.bf16 %v2287, %v2286
      %v2671 = vpack.c.bf16 %v2289, %v2288
      %v2672 = vpack.c.bf16 %v2291, %v2290
      %v2673 = vpack.c.bf16 %v2293, %v2292
      %v2674 = vpack.c.bf16 %v2295, %v2294
      %v2675 = vpack.c.bf16 %v2297, %v2296
      %v2676 = vpack.c.bf16 %v2299, %v2298
      %v2677 = vpack.c.bf16 %v2301, %v2300
      %v2678 = vpack.c.bf16 %v2303, %v2302
      %v2679 = vpack.c.bf16 %v2305, %v2304
      %v2680 = vpack.c.bf16 %v2307, %v2306
      %v2681 = vpack.c.bf16 %v2309, %v2308
      %v2682 = vpack.c.bf16 %v2311, %v2310
      %v2683 = vpack.c.bf16 %v2313, %v2312
      %v2684 = vpack.c.bf16 %v2315, %v2314
      %v2685 = vpack.c.bf16 %v2317, %v2316
      %v2686 = vxor.u32 %v2670, 2147516416
      %v2687 = vxor.u32 %v2671, 2147516416
      %v2688 = vxor.u32 %v2672, 2147516416
      %v2689 = vxor.u32 %v2673, 2147516416
      %v2690 = vxor.u32 %v2674, 2147516416
      %v2691 = vxor.u32 %v2675, 2147516416
      %v2692 = vxor.u32 %v2676, 2147516416
      %v2693 = vxor.u32 %v2677, 2147516416
      %v2694 = vxor.u32 %v2678, 2147516416
      %v2695 = vxor.u32 %v2679, 2147516416
      %v2696 = vxor.u32 %v2680, 2147516416
      %v2697 = vxor.u32 %v2681, 2147516416
      %v2698 = vxor.u32 %v2682, 2147516416
      %v2699 = vxor.u32 %v2683, 2147516416
      %v2700 = vxor.u32 %v2684, 2147516416
      %v2701 = vxor.u32 %v2685, 2147516416
      %v2703 = vmul.bf16 %v2686, 1069105081
      %v2704 = vpow.bf16.pop %v2703
      %v2706 = vmul.bf16 %v2687, 1069105081
      %v2707 = vpow.bf16.pop %v2706
      %v2709 = vmul.bf16 %v2688, 1069105081
      %v2710 = vpow.bf16.pop %v2709
      %v2712 = vmul.bf16 %v2689, 1069105081
      %v2713 = vpow.bf16.pop %v2712
      %v2715 = vmul.bf16 %v2690, 1069105081
      %v2716 = vpow.bf16.pop %v2715
      %v2718 = vmul.bf16 %v2691, 1069105081
      %v2719 = vpow.bf16.pop %v2718
      %v2721 = vmul.bf16 %v2692, 1069105081
      %v2722 = vpow.bf16.pop %v2721
      %v2724 = vmul.bf16 %v2693, 1069105081
      %v2725 = vpow.bf16.pop %v2724
      %v2727 = vmul.bf16 %v2694, 1069105081
      %v2728 = vpow.bf16.pop %v2727
      %v2730 = vmul.bf16 %v2695, 1069105081
      %v2731 = vpow.bf16.pop %v2730
      %v2733 = vmul.bf16 %v2696, 1069105081
      %v2734 = vpow.bf16.pop %v2733
      %v2736 = vmul.bf16 %v2697, 1069105081
      %v2737 = vpow.bf16.pop %v2736
      %v2739 = vmul.bf16 %v2698, 1069105081
      %v2740 = vpow.bf16.pop %v2739
      %v2742 = vmul.bf16 %v2699, 1069105081
      %v2743 = vpow.bf16.pop %v2742
      %v2745 = vmul.bf16 %v2700, 1069105081
      %v2746 = vpow.bf16.pop %v2745
      %v2748 = vmul.bf16 %v2701, 1069105081
      %v2749 = vpow.bf16.pop %v2748
      %v2750 = vadd.bf16 %v2704, 1065369472
      %v2751 = vadd.bf16 %v2707, 1065369472
      %v2752 = vadd.bf16 %v2710, 1065369472
      %v2753 = vadd.bf16 %v2713, 1065369472
      %v2754 = vadd.bf16 %v2716, 1065369472
      %v2755 = vadd.bf16 %v2719, 1065369472
      %v2756 = vadd.bf16 %v2722, 1065369472
      %v2757 = vadd.bf16 %v2725, 1065369472
      %v2758 = vadd.bf16 %v2728, 1065369472
      %v2759 = vadd.bf16 %v2731, 1065369472
      %v2760 = vadd.bf16 %v2734, 1065369472
      %v2761 = vadd.bf16 %v2737, 1065369472
      %v2762 = vadd.bf16 %v2740, 1065369472
      %v2763 = vadd.bf16 %v2743, 1065369472
      %v2764 = vadd.bf16 %v2746, 1065369472
      %v2765 = vadd.bf16 %v2749, 1065369472
      %v2766 = vrcp.bf16.pop %v2750
      %v2767 = vmul.bf16 1065369472, %v2766
      %v2768 = vrcp.bf16.pop %v2751
      %v2769 = vmul.bf16 1065369472, %v2768
      %v2770 = vrcp.bf16.pop %v2752
      %v2771 = vmul.bf16 1065369472, %v2770
      %v2772 = vrcp.bf16.pop %v2753
      %v2773 = vmul.bf16 1065369472, %v2772
      %v2774 = vrcp.bf16.pop %v2754
      %v2775 = vmul.bf16 1065369472, %v2774
      %v2776 = vrcp.bf16.pop %v2755
      %v2777 = vmul.bf16 1065369472, %v2776
      %v2778 = vrcp.bf16.pop %v2756
      %v2779 = vmul.bf16 1065369472, %v2778
      %v2780 = vrcp.bf16.pop %v2757
      %v2781 = vmul.bf16 1065369472, %v2780
      %v2782 = vrcp.bf16.pop %v2758
      %v2783 = vmul.bf16 1065369472, %v2782
      %v2784 = vrcp.bf16.pop %v2759
      %v2785 = vmul.bf16 1065369472, %v2784
      %v2786 = vrcp.bf16.pop %v2760
      %v2787 = vmul.bf16 1065369472, %v2786
      %v2788 = vrcp.bf16.pop %v2761
      %v2789 = vmul.bf16 1065369472, %v2788
      %v2790 = vrcp.bf16.pop %v2762
      %v2791 = vmul.bf16 1065369472, %v2790
      %v2792 = vrcp.bf16.pop %v2763
      %v2793 = vmul.bf16 1065369472, %v2792
      %v2794 = vrcp.bf16.pop %v2764
      %v2795 = vmul.bf16 1065369472, %v2794
      %v2796 = vrcp.bf16.pop %v2765
      %v2797 = vmul.bf16 1065369472, %v2796
      %v2798 = vunpack.c.l.bf16 %v2767
      %v2799 = vunpack.c.h.bf16 %v2767
      %v2800 = vunpack.c.l.bf16 %v2769
      %v2801 = vunpack.c.h.bf16 %v2769
      %v2802 = vunpack.c.l.bf16 %v2771
      %v2803 = vunpack.c.h.bf16 %v2771
      %v2804 = vunpack.c.l.bf16 %v2773
      %v2805 = vunpack.c.h.bf16 %v2773
      %v2806 = vunpack.c.l.bf16 %v2775
      %v2807 = vunpack.c.h.bf16 %v2775
      %v2808 = vunpack.c.l.bf16 %v2777
      %v2809 = vunpack.c.h.bf16 %v2777
      %v2810 = vunpack.c.l.bf16 %v2779
      %v2811 = vunpack.c.h.bf16 %v2779
      %v2812 = vunpack.c.l.bf16 %v2781
      %v2813 = vunpack.c.h.bf16 %v2781
      %v2814 = vunpack.c.l.bf16 %v2783
      %v2815 = vunpack.c.h.bf16 %v2783
      %v2816 = vunpack.c.l.bf16 %v2785
      %v2817 = vunpack.c.h.bf16 %v2785
      %v2818 = vunpack.c.l.bf16 %v2787
      %v2819 = vunpack.c.h.bf16 %v2787
      %v2820 = vunpack.c.l.bf16 %v2789
      %v2821 = vunpack.c.h.bf16 %v2789
      %v2822 = vunpack.c.l.bf16 %v2791
      %v2823 = vunpack.c.h.bf16 %v2791
      %v2824 = vunpack.c.l.bf16 %v2793
      %v2825 = vunpack.c.h.bf16 %v2793
      %v2826 = vunpack.c.l.bf16 %v2795
      %v2827 = vunpack.c.h.bf16 %v2795
      %v2828 = vunpack.c.l.bf16 %v2797
      %v2829 = vunpack.c.h.bf16 %v2797
      %v2830 = vadd.f32 %v2638, %v2798
      %v2831 = vadd.f32 %v2639, %v2799
      %v2832 = vadd.f32 %v2640, %v2800
      %v2833 = vadd.f32 %v2641, %v2801
      %v2834 = vadd.f32 %v2642, %v2802
      %v2835 = vadd.f32 %v2643, %v2803
      %v2836 = vadd.f32 %v2644, %v2804
      %v2837 = vadd.f32 %v2645, %v2805
      %v2838 = vadd.f32 %v2646, %v2806
      %v2839 = vadd.f32 %v2647, %v2807
      %v2840 = vadd.f32 %v2648, %v2808
      %v2841 = vadd.f32 %v2649, %v2809
      %v2842 = vadd.f32 %v2650, %v2810
      %v2843 = vadd.f32 %v2651, %v2811
      %v2844 = vadd.f32 %v2652, %v2812
      %v2845 = vadd.f32 %v2653, %v2813
      %v2846 = vadd.f32 %v2654, %v2814
      %v2847 = vadd.f32 %v2655, %v2815
      %v2848 = vadd.f32 %v2656, %v2816
      %v2849 = vadd.f32 %v2657, %v2817
      %v2850 = vadd.f32 %v2658, %v2818
      %v2851 = vadd.f32 %v2659, %v2819
      %v2852 = vadd.f32 %v2660, %v2820
      %v2853 = vadd.f32 %v2661, %v2821
      %v2854 = vadd.f32 %v2662, %v2822
      %v2855 = vadd.f32 %v2663, %v2823
      %v2856 = vadd.f32 %v2664, %v2824
      %v2857 = vadd.f32 %v2665, %v2825
      %v2858 = vadd.f32 %v2666, %v2826
      %v2859 = vadd.f32 %v2667, %v2827
      %v2860 = vadd.f32 %v2668, %v2828
      %v2861 = vadd.f32 %v2669, %v2829
      %v2862 = vunpack.c.l.bf16 %v429
      %v2863 = vunpack.c.l.bf16 %v430
      %v2864 = vunpack.c.l.bf16 %v431
      %v2865 = vunpack.c.l.bf16 %v432
      %v2866 = vunpack.c.l.bf16 %v433
      %v2867 = vunpack.c.l.bf16 %v434
      %v2868 = vunpack.c.l.bf16 %v435
      %v2869 = vunpack.c.l.bf16 %v436
      %v2870 = vunpack.c.l.bf16 %v437
      %v2871 = vunpack.c.l.bf16 %v438
      %v2872 = vunpack.c.l.bf16 %v439
      %v2873 = vunpack.c.l.bf16 %v440
      %v2874 = vunpack.c.l.bf16 %v441
      %v2875 = vunpack.c.l.bf16 %v442
      %v2876 = vunpack.c.l.bf16 %v443
      %v2877 = vunpack.c.l.bf16 %v444
      %v2878 = vunpack.c.l.bf16 %v445
      %v2879 = vunpack.c.l.bf16 %v446
      %v2880 = vunpack.c.l.bf16 %v447
      %v2881 = vunpack.c.l.bf16 %v448
      %v2882 = vunpack.c.l.bf16 %v449
      %v2883 = vunpack.c.l.bf16 %v450
      %v2884 = vunpack.c.l.bf16 %v451
      %v2885 = vunpack.c.l.bf16 %v452
      %v2886 = vunpack.c.l.bf16 %v453
      %v2887 = vunpack.c.l.bf16 %v454
      %v2888 = vunpack.c.l.bf16 %v455
      %v2889 = vunpack.c.l.bf16 %v456
      %v2890 = vunpack.c.l.bf16 %v457
      %v2891 = vunpack.c.l.bf16 %v458
      %v2892 = vunpack.c.l.bf16 %v459
      %v2893 = vunpack.c.l.bf16 %v460
      %v2894 = vmul.f32 %v2830, %v2862
      %v2895 = vmul.f32 %v2831, %v2863
      %v2896 = vmul.f32 %v2832, %v2864
      %v2897 = vmul.f32 %v2833, %v2865
      %v2898 = vmul.f32 %v2834, %v2866
      %v2899 = vmul.f32 %v2835, %v2867
      %v2900 = vmul.f32 %v2836, %v2868
      %v2901 = vmul.f32 %v2837, %v2869
      %v2902 = vmul.f32 %v2838, %v2870
      %v2903 = vmul.f32 %v2839, %v2871
      %v2904 = vmul.f32 %v2840, %v2872
      %v2905 = vmul.f32 %v2841, %v2873
      %v2906 = vmul.f32 %v2842, %v2874
      %v2907 = vmul.f32 %v2843, %v2875
      %v2908 = vmul.f32 %v2844, %v2876
      %v2909 = vmul.f32 %v2845, %v2877
      %v2910 = vmul.f32 %v2846, %v2878
      %v2911 = vmul.f32 %v2847, %v2879
      %v2912 = vmul.f32 %v2848, %v2880
      %v2913 = vmul.f32 %v2849, %v2881
      %v2914 = vmul.f32 %v2850, %v2882
      %v2915 = vmul.f32 %v2851, %v2883
      %v2916 = vmul.f32 %v2852, %v2884
      %v2917 = vmul.f32 %v2853, %v2885
      %v2918 = vmul.f32 %v2854, %v2886
      %v2919 = vmul.f32 %v2855, %v2887
      %v2920 = vmul.f32 %v2856, %v2888
      %v2921 = vmul.f32 %v2857, %v2889
      %v2922 = vmul.f32 %v2858, %v2890
      %v2923 = vmul.f32 %v2859, %v2891
      %v2924 = vmul.f32 %v2860, %v2892
      %v2925 = vmul.f32 %v2861, %v2893
      %v2926 = vpack.c.bf16 %v2895, %v2894
      %v2927 = vpack.c.bf16 %v2897, %v2896
      %v2928 = vpack.c.bf16 %v2899, %v2898
      %v2929 = vpack.c.bf16 %v2901, %v2900
      %v2930 = vpack.c.bf16 %v2903, %v2902
      %v2931 = vpack.c.bf16 %v2905, %v2904
      %v2932 = vpack.c.bf16 %v2907, %v2906
      %v2933 = vpack.c.bf16 %v2909, %v2908
      %v2934 = vpack.c.bf16 %v2911, %v2910
      %v2935 = vpack.c.bf16 %v2913, %v2912
      %v2936 = vpack.c.bf16 %v2915, %v2914
      %v2937 = vpack.c.bf16 %v2917, %v2916
      %v2938 = vpack.c.bf16 %v2919, %v2918
      %v2939 = vpack.c.bf16 %v2921, %v2920
      %v2940 = vpack.c.bf16 %v2923, %v2922
      %v2941 = vpack.c.bf16 %v2925, %v2924
      %v2958 = vunpack.c.l.b16 %v2926
      %v2959 = vunpack.c.h.b16 %v2926
      %v2960 = vunpack.c.l.b16 %v2927
      %v2961 = vunpack.c.h.b16 %v2927
      %v2962 = vunpack.c.l.b16 %v2928
      %v2963 = vunpack.c.h.b16 %v2928
      %v2964 = vunpack.c.l.b16 %v2929
      %v2965 = vunpack.c.h.b16 %v2929
      %v2966 = vunpack.c.l.b16 %v2930
      %v2967 = vunpack.c.h.b16 %v2930
      %v2968 = vunpack.c.l.b16 %v2931
      %v2969 = vunpack.c.h.b16 %v2931
      %v2970 = vunpack.c.l.b16 %v2932
      %v2971 = vunpack.c.h.b16 %v2932
      %v2972 = vunpack.c.l.b16 %v2933
      %v2973 = vunpack.c.h.b16 %v2933
      %v2974 = vunpack.c.l.b16 %v2934
      %v2975 = vunpack.c.h.b16 %v2934
      %v2976 = vunpack.c.l.b16 %v2935
      %v2977 = vunpack.c.h.b16 %v2935
      %v2978 = vunpack.c.l.b16 %v2936
      %v2979 = vunpack.c.h.b16 %v2936
      %v2980 = vunpack.c.l.b16 %v2937
      %v2981 = vunpack.c.h.b16 %v2937
      %v2982 = vunpack.c.l.b16 %v2938
      %v2983 = vunpack.c.h.b16 %v2938
      %v2984 = vunpack.c.l.b16 %v2939
      %v2985 = vunpack.c.h.b16 %v2939
      %v2986 = vunpack.c.l.b16 %v2940
      %v2987 = vunpack.c.h.b16 %v2940
      %v2988 = vunpack.c.l.b16 %v2941
      %v2989 = vunpack.c.h.b16 %v2941
      %v2990 = vpack.c.b16 %v2958, %v2958
      %v2991 = vpack.c.b16 %v2959, %v2959
      %v2992 = vpack.c.b16 %v2960, %v2960
      %v2993 = vpack.c.b16 %v2961, %v2961
      %v2994 = vpack.c.b16 %v2962, %v2962
      %v2995 = vpack.c.b16 %v2963, %v2963
      %v2996 = vpack.c.b16 %v2964, %v2964
      %v2997 = vpack.c.b16 %v2965, %v2965
      %v2998 = vpack.c.b16 %v2966, %v2966
      %v2999 = vpack.c.b16 %v2967, %v2967
      %v3000 = vpack.c.b16 %v2968, %v2968
      %v3001 = vpack.c.b16 %v2969, %v2969
      %v3002 = vpack.c.b16 %v2970, %v2970
      %v3003 = vpack.c.b16 %v2971, %v2971
      %v3004 = vpack.c.b16 %v2972, %v2972
      %v3005 = vpack.c.b16 %v2973, %v2973
      %v3006 = vpack.c.b16 %v2974, %v2974
      %v3007 = vpack.c.b16 %v2975, %v2975
      %v3008 = vpack.c.b16 %v2976, %v2976
      %v3009 = vpack.c.b16 %v2977, %v2977
      %v3010 = vpack.c.b16 %v2978, %v2978
      %v3011 = vpack.c.b16 %v2979, %v2979
      %v3012 = vpack.c.b16 %v2980, %v2980
      %v3013 = vpack.c.b16 %v2981, %v2981
      %v3014 = vpack.c.b16 %v2982, %v2982
      %v3015 = vpack.c.b16 %v2983, %v2983
      %v3016 = vpack.c.b16 %v2984, %v2984
      %v3017 = vpack.c.b16 %v2985, %v2985
      %v3018 = vpack.c.b16 %v2986, %v2986
      %v3019 = vpack.c.b16 %v2987, %v2987
      %v3020 = vpack.c.b16 %v2988, %v2988
      %v3021 = vpack.c.b16 %v2989, %v2989
      %3054 = vst [vmem:[%s391] sm:$0xf] %v2990
      %3055 = vst [vmem:[%s391 + $0x4] sm:$0xf] %v2991
      %3056 = vst [vmem:[%s391 + $0x8] sm:$0xf] %v2992
      %3057 = vst [vmem:[%s391 + $0xc] sm:$0xf] %v2993
      %3058 = vst [vmem:[%s391 + $0x10] sm:$0xf] %v2994
      %3059 = vst [vmem:[%s391 + $0x14] sm:$0xf] %v2995
      %3060 = vst [vmem:[%s391 + $0x18] sm:$0xf] %v2996
      %3061 = vst [vmem:[%s391 + $0x1c] sm:$0xf] %v2997
      %3062 = vst [vmem:[%s391 + $0x20] sm:$0xf] %v2998
      %3063 = vst [vmem:[%s391 + $0x24] sm:$0xf] %v2999
      %3064 = vst [vmem:[%s391 + $0x28] sm:$0xf] %v3000
      %3065 = vst [vmem:[%s391 + $0x2c] sm:$0xf] %v3001
      %3066 = vst [vmem:[%s391 + $0x30] sm:$0xf] %v3002
      %3067 = vst [vmem:[%s391 + $0x34] sm:$0xf] %v3003
      %3068 = vst [vmem:[%s391 + $0x38] sm:$0xf] %v3004
      %3069 = vst [vmem:[%s391 + $0x3c] sm:$0xf] %v3005
      %3070 = vst [vmem:[%s391 + $0x40] sm:$0xf] %v3006
      %3071 = vst [vmem:[%s391 + $0x44] sm:$0xf] %v3007
      %3072 = vst [vmem:[%s391 + $0x48] sm:$0xf] %v3008
      %3073 = vst [vmem:[%s391 + $0x4c] sm:$0xf] %v3009
      %3074 = vst [vmem:[%s391 + $0x50] sm:$0xf] %v3010
      %3075 = vst [vmem:[%s391 + $0x54] sm:$0xf] %v3011
      %3076 = vst [vmem:[%s391 + $0x58] sm:$0xf] %v3012
      %3077 = vst [vmem:[%s391 + $0x5c] sm:$0xf] %v3013
      %3078 = vst [vmem:[%s391 + $0x60] sm:$0xf] %v3014
      %3079 = vst [vmem:[%s391 + $0x64] sm:$0xf] %v3015
      %3080 = vst [vmem:[%s391 + $0x68] sm:$0xf] %v3016
      %3081 = vst [vmem:[%s391 + $0x6c] sm:$0xf] %v3017
      %3082 = vst [vmem:[%s391 + $0x70] sm:$0xf] %v3018
      %3083 = vst [vmem:[%s391 + $0x74] sm:$0xf] %v3019
      %3084 = vst [vmem:[%s391 + $0x78] sm:$0xf] %v3020
      %3085 = vst [vmem:[%s391 + $0x7c] sm:$0xf] %v3021
      %s3086 = smul.u32 16, %s21
      %p3087 = scmp.lt.s32.totalorder %s20, 1
      %s3088 = scalar_select %p3087, %s20, 1
      %p3089 = scmp.lt.s32.totalorder %s3086, 15
      %s3090 = scalar_select %p3089, %s3086, 15
      %s3091 = smul.addr %s3090, 2
      %s3092 = smul.addr %s3088, 32
      %s3093 = sadd.s32 %s3091, %s3092
      %s3094 = smul.addr %s3093, 4
      %s3095 = scalar_lea.vmem %s5, %s3094
      // Predicated region
      $region41: #{recon_block.1} parent=39 // pred_check
        %p3096 = pneg %p190
      $region42: #{recon_block.1} parent=39 // pred_check_branch
        %3098 = sbr.rel (%p3096) target = $region44
      $region43: #{recon_block.1} parent=39 // pred_region
        %s3099 = smul.u32 16, %s21
      $region44: #{recon_block.1} parent=39 // pred_fallthru
        _
    $region40: #{recon_block.1} parent=5 // pred_fallthru
      _
    %p3100 = scmp.le.s32.totalorder 2, %s11
    // Predicated region
    $region45: #{recon_block.1} parent=5 // pred_check
      %p3101 = pneg %p3100
    $region46: #{recon_block.1} parent=5 // pred_check_branch
      %3103 = sbr.rel (%p3101) target = $region48
    $region47: #{recon_block.1} parent=5 // pred_region
      %s3104 = ssub.s32 %s11, 2
      // Predicated region
      $region49: #{recon_block.1} parent=47 // pred_check
        %p3105 = pneg %p196
      $region50: #{recon_block.1} parent=47 // pred_check_branch
        %3107 = sbr.rel (%p3105) target = $region52
      $region51: #{recon_block.1} parent=47 // pred_region
        %s3108 = smul.u32 16, %s23
        %p3109 = scmp.lt.s32.totalorder %s22, 1
        %s3110 = scalar_select %p3109, %s22, 1
        %p3111 = scmp.lt.s32.totalorder %s3108, 15
        %s3112 = scalar_select %p3111, %s3108, 15
        %s3113 = smul.addr %s3112, 2
        %s3114 = smul.addr %s3110, 32
        %s3115 = sadd.s32 %s3113, %s3114
        %s3116 = smul.addr %s3115, 4
        %s3117 = scalar_lea.vmem %s5, %s3116
      $region52: #{recon_block.1} parent=47 // pred_fallthru
        _
    $region48: #{recon_block.1} parent=5 // pred_fallthru
      _
  $region6: #{recon_block.1} parent=0 // loop_footer
    %s15 = sadd.s32 1, %s11
  $region7: #{recon_block.1} parent=0 // loop_footer_branch
    %10 = sbr.rel target = $region3
  $region8: #{recon_block.1} parent=0 // loop_exit
    _

</llo_original>
